<compile_context>
chip_gen: v7x
topology: tpu7x:2x2x1
jax: 0.10.0
libtpu: 0.0.40
codegen_flags: <defaults>
</compile_context>

<pallas_src>
import jax
import jax.numpy as jnp
from jax.experimental import pallas as pl
from jax.experimental.pallas import tpu as pltpu

ROWS, COLS = 6, 7
IN = ROWS * COLS          # 42
L1, L2, L3, L4 = 300, 500, 50, 25
OUT_PAD = 128             # lane-dense padded width of the final layer


# ---------------------------------------------------------------------------
# Fused kernel: 5 Linear layers + sigmoids, dropout = identity (eval mode).
#   x: (bm, 42) f32, weights bf16, biases f32 (1, N), out: (bm, 128) f32
# ---------------------------------------------------------------------------
def dqn_kernel(x_ref, w1_ref, b1_ref, w2_ref, b2_ref, w3_ref, b3_ref,
               w4_ref, b4_ref, w5_ref, b5_ref, o_ref):
    f32 = jnp.float32
    h = jnp.dot(x_ref[...], w1_ref[...].astype(f32), preferred_element_type=f32)
    h = jax.nn.sigmoid(h + b1_ref[...])
    h = jnp.dot(h, w2_ref[...].astype(f32), preferred_element_type=f32)
    h = jax.nn.sigmoid(h + b2_ref[...])        # dropout(0.5) == identity (eval)
    h = jnp.dot(h, w3_ref[...].astype(f32), preferred_element_type=f32)
    h = jax.nn.sigmoid(h + b3_ref[...])        # dropout(0.5) == identity (eval)
    h = jnp.dot(h, w4_ref[...].astype(f32), preferred_element_type=f32)
    h = jax.nn.sigmoid(h + b4_ref[...])
    y = jnp.dot(h, w5_ref[...].astype(f32), preferred_element_type=f32)
    o_ref[...] = y + b5_ref[...]               # 128-lane unmasked store


def _cost_estimate(batch):
    mults = IN * L1 + L1 * L2 + L2 * L3 + L3 * L4 + L4 * OUT_PAD
    weight_bytes = 2 * mults                                   # bf16 weights
    bias_bytes = 4 * (L1 + L2 + L3 + L4 + OUT_PAD)
    return pl.CostEstimate(
        flops=2 * batch * mults,
        transcendentals=batch * (L1 + L2 + L3 + L4),           # sigmoids
        bytes_accessed=batch * IN * 4 + batch * OUT_PAD * 4
        + weight_bytes + bias_bytes,
    )


def dqn_forward(grid, prepared_params):
    """grid: (B, 6, 7) float32 -> (B, 7) float32."""
    w1, b1, w2, b2, w3, b3, w4, b4, w5p, b5p = prepared_params
    B = grid.shape[0]
    x = grid.reshape(B, IN).astype(jnp.float32)

    # One block covers the small demo batch; for large B the batch axis tiles
    # and shards across TensorCores via the "parallel" dimension semantics.
    block_b = B if B <= 256 else 256
    n_blocks = pl.cdiv(B, block_b)

    wspec = lambda shape: pl.BlockSpec(shape, lambda i: (0, 0))

    out = pl.pallas_call(
        dqn_kernel,
        out_shape=jax.ShapeDtypeStruct((B, OUT_PAD), jnp.float32),
        grid=(n_blocks,),
        in_specs=[
            pl.BlockSpec((block_b, IN), lambda i: (i, 0)),
            wspec((IN, L1)), wspec((1, L1)),
            wspec((L1, L2)), wspec((1, L2)),
            wspec((L2, L3)), wspec((1, L3)),
            wspec((L3, L4)), wspec((1, L4)),
            wspec((L4, OUT_PAD)), wspec((1, OUT_PAD)),
        ],
        out_specs=pl.BlockSpec((block_b, OUT_PAD), lambda i: (i, 0)),
        compiler_params=pltpu.CompilerParams(
            dimension_semantics=("parallel",)),
        cost_estimate=_cost_estimate(B),
    )(x, w1, b1, w2, b2, w3, b3, w4, b4, w5p, b5p)

    return out[:, :COLS]


# ---------------------------------------------------------------------------
# Parameter handling
# ---------------------------------------------------------------------------
def init_params(key):
    ks = jax.random.split(key, 10)
    s = 0.1
    w1 = s * jax.random.normal(ks[0], (IN, L1), jnp.float32)
    b1 = s * jax.random.normal(ks[1], (L1,), jnp.float32)
    w2 = s * jax.random.normal(ks[2], (L1, L2), jnp.float32)
    b2 = s * jax.random.normal(ks[3], (L2,), jnp.float32)
    w3 = s * jax.random.normal(ks[4], (L2, L3), jnp.float32)
    b3 = s * jax.random.normal(ks[5], (L3,), jnp.float32)
    w4 = s * jax.random.normal(ks[6], (L3, L4), jnp.float32)
    b4 = s * jax.random.normal(ks[7], (L4,), jnp.float32)
    w5 = s * jax.random.normal(ks[8], (L4, COLS), jnp.float32)
    b5 = s * jax.random.normal(ks[9], (COLS,), jnp.float32)
    return (w1, b1, w2, b2, w3, b3, w4, b4, w5, b5)


def prepare_params(params):
    """One-time prep: bf16 weights, (1,N) biases, lane-dense padded final layer."""
    w1, b1, w2, b2, w3, b3, w4, b4, w5, b5 = params
    bf16 = jnp.bfloat16
    w5p = jnp.zeros((L4, OUT_PAD), jnp.float32).at[:, :COLS].set(w5)
    b5p = jnp.zeros((OUT_PAD,), jnp.float32).at[:COLS].set(b5)
    return (w1.astype(bf16), b1.reshape(1, L1).astype(jnp.float32),
            w2.astype(bf16), b2.reshape(1, L2).astype(jnp.float32),
            w3.astype(bf16), b3.reshape(1, L3).astype(jnp.float32),
            w4.astype(bf16), b4.reshape(1, L4).astype(jnp.float32),
            w5p.astype(bf16), b5p.reshape(1, OUT_PAD).astype(jnp.float32))


def reference_forward(grid, params):
    """Pure-JAX f32 replica of the PyTorch forward (eval-mode dropout)."""
    w1, b1, w2, b2, w3, b3, w4, b4, w5, b5 = params
    x = grid.reshape(grid.shape[0], -1)
    x = jax.nn.sigmoid(x @ w1 + b1)
    x = jax.nn.sigmoid(x @ w2 + b2)     # dropout == identity in eval
    x = jax.nn.sigmoid(x @ w3 + b3)     # dropout == identity in eval
    x = jax.nn.sigmoid(x @ w4 + b4)
    return x @ w5 + b5


if __name__ == "__main__":
    key = jax.random.PRNGKey(0)
    k_in, k_par = jax.random.split(key)

    B = 2
    grid_in = jax.random.normal(k_in, (B, ROWS, COLS), jnp.float32)
    params = init_params(k_par)
    prepared = prepare_params(params)

    out = jax.block_until_ready(dqn_forward(grid_in, prepared))
    ref = jax.block_until_ready(reference_forward(grid_in, params))

    assert out.shape == (B, COLS), out.shape
    assert jnp.allclose(out, ref, atol=1e-2, rtol=1e-2), (out, ref)
    print("KERNEL_OK")
</pallas_src>

<mosaic_0001>
module attributes {stable_mosaic.version = 11 : i64} {
  func.func @dqn_kernel(%arg0: i32, %arg1: memref<2x42xf32, #tpu.memory_space<vmem>>, %arg2: memref<42x300xbf16, #tpu.memory_space<vmem>>, %arg3: memref<1x300xf32, #tpu.memory_space<vmem>>, %arg4: memref<300x500xbf16, #tpu.memory_space<vmem>>, %arg5: memref<1x500xf32, #tpu.memory_space<vmem>>, %arg6: memref<500x50xbf16, #tpu.memory_space<vmem>>, %arg7: memref<1x50xf32, #tpu.memory_space<vmem>>, %arg8: memref<50x25xbf16, #tpu.memory_space<vmem>>, %arg9: memref<1x25xf32, #tpu.memory_space<vmem>>, %arg10: memref<25x128xbf16, #tpu.memory_space<vmem>>, %arg11: memref<1x128xf32, #tpu.memory_space<vmem>>, %arg12: memref<2x128xf32, #tpu.memory_space<vmem>>) attributes {dimension_semantics = [#tpu.dimension_semantics<parallel>], iteration_bounds = array<i64: 1>, scalar_prefetch = 0 : i64, scratch_operands = 0 : i64, tpu.core_type = #tpu.core_type<tc>, window_params = [{transform_indices = @transform_0, window_bounds = array<i64: 2, 42>}, {pipeline_mode = #tpu.pipeline_mode<synchronous>, transform_indices = @transform_1, window_bounds = array<i64: 42, 300>}, {pipeline_mode = #tpu.pipeline_mode<synchronous>, transform_indices = @transform_2, window_bounds = array<i64: 1, 300>}, {pipeline_mode = #tpu.pipeline_mode<synchronous>, transform_indices = @transform_3, window_bounds = array<i64: 300, 500>}, {pipeline_mode = #tpu.pipeline_mode<synchronous>, transform_indices = @transform_4, window_bounds = array<i64: 1, 500>}, {pipeline_mode = #tpu.pipeline_mode<synchronous>, transform_indices = @transform_5, window_bounds = array<i64: 500, 50>}, {pipeline_mode = #tpu.pipeline_mode<synchronous>, transform_indices = @transform_6, window_bounds = array<i64: 1, 50>}, {pipeline_mode = #tpu.pipeline_mode<synchronous>, transform_indices = @transform_7, window_bounds = array<i64: 50, 25>}, {pipeline_mode = #tpu.pipeline_mode<synchronous>, transform_indices = @transform_8, window_bounds = array<i64: 1, 25>}, {pipeline_mode = #tpu.pipeline_mode<synchronous>, transform_indices = @transform_9, window_bounds = array<i64: 25, 128>}, {pipeline_mode = #tpu.pipeline_mode<synchronous>, transform_indices = @transform_10, window_bounds = array<i64: 1, 128>}, {transform_indices = @transform_11, window_bounds = array<i64: 2, 128>}]} {
    %c0 = arith.constant 0 : index
    %c0_0 = arith.constant 0 : index
    %0 = vector.load %arg1[%c0, %c0_0] : memref<2x42xf32, #tpu.memory_space<vmem>>, vector<2x42xf32>
    %c0_1 = arith.constant 0 : index
    %c0_2 = arith.constant 0 : index
    %1 = vector.load %arg2[%c0_1, %c0_2] : memref<42x300xbf16, #tpu.memory_space<vmem>>, vector<42x300xbf16>
    %2 = arith.extf %1 : vector<42x300xbf16> to vector<42x300xf32>
    %cst = arith.constant dense<0.000000e+00> : vector<2x300xf32>
    %3 = tpu.matmul %0, %2, %cst {dimension_numbers = #tpu.dot_dimension_numbers<[1], [0], [0], [1], [0, 0, 1, 1], [], []>} : vector<2x42xf32>, vector<42x300xf32>, vector<2x300xf32> -> vector<2x300xf32>
    %c0_3 = arith.constant 0 : index
    %c0_4 = arith.constant 0 : index
    %4 = vector.load %arg3[%c0_3, %c0_4] : memref<1x300xf32, #tpu.memory_space<vmem>>, vector<1x300xf32>
    %5 = vector.broadcast %4 : vector<1x300xf32> to vector<2x300xf32>
    %6 = arith.addf %3, %5 : vector<2x300xf32>
    %7 = arith.negf %6 : vector<2x300xf32>
    %8 = math.exp %7 : vector<2x300xf32>
    %cst_5 = arith.constant 1.000000e+00 : f32
    %9 = vector.broadcast %cst_5 : f32 to vector<2x300xf32>
    %10 = arith.addf %9, %8 : vector<2x300xf32>
    %11 = arith.divf %9, %10 : vector<2x300xf32>
    %c0_6 = arith.constant 0 : index
    %c0_7 = arith.constant 0 : index
    %12 = vector.load %arg4[%c0_6, %c0_7] : memref<300x500xbf16, #tpu.memory_space<vmem>>, vector<300x500xbf16>
    %13 = arith.extf %12 : vector<300x500xbf16> to vector<300x500xf32>
    %cst_8 = arith.constant dense<0.000000e+00> : vector<2x500xf32>
    %14 = tpu.matmul %11, %13, %cst_8 {dimension_numbers = #tpu.dot_dimension_numbers<[1], [0], [0], [1], [0, 0, 1, 1], [], []>} : vector<2x300xf32>, vector<300x500xf32>, vector<2x500xf32> -> vector<2x500xf32>
    %c0_9 = arith.constant 0 : index
    %c0_10 = arith.constant 0 : index
    %15 = vector.load %arg5[%c0_9, %c0_10] : memref<1x500xf32, #tpu.memory_space<vmem>>, vector<1x500xf32>
    %16 = vector.broadcast %15 : vector<1x500xf32> to vector<2x500xf32>
    %17 = arith.addf %14, %16 : vector<2x500xf32>
    %18 = arith.negf %17 : vector<2x500xf32>
    %19 = math.exp %18 : vector<2x500xf32>
    %cst_11 = arith.constant 1.000000e+00 : f32
    %20 = vector.broadcast %cst_11 : f32 to vector<2x500xf32>
    %21 = arith.addf %20, %19 : vector<2x500xf32>
    %22 = arith.divf %20, %21 : vector<2x500xf32>
    %c0_12 = arith.constant 0 : index
    %c0_13 = arith.constant 0 : index
    %23 = vector.load %arg6[%c0_12, %c0_13] : memref<500x50xbf16, #tpu.memory_space<vmem>>, vector<500x50xbf16>
    %24 = arith.extf %23 : vector<500x50xbf16> to vector<500x50xf32>
    %cst_14 = arith.constant dense<0.000000e+00> : vector<2x50xf32>
    %25 = tpu.matmul %22, %24, %cst_14 {dimension_numbers = #tpu.dot_dimension_numbers<[1], [0], [0], [1], [0, 0, 1, 1], [], []>} : vector<2x500xf32>, vector<500x50xf32>, vector<2x50xf32> -> vector<2x50xf32>
    %c0_15 = arith.constant 0 : index
    %c0_16 = arith.constant 0 : index
    %26 = vector.load %arg7[%c0_15, %c0_16] : memref<1x50xf32, #tpu.memory_space<vmem>>, vector<1x50xf32>
    %27 = vector.broadcast %26 : vector<1x50xf32> to vector<2x50xf32>
    %28 = arith.addf %25, %27 : vector<2x50xf32>
    %29 = arith.negf %28 : vector<2x50xf32>
    %30 = math.exp %29 : vector<2x50xf32>
    %cst_17 = arith.constant 1.000000e+00 : f32
    %31 = vector.broadcast %cst_17 : f32 to vector<2x50xf32>
    %32 = arith.addf %31, %30 : vector<2x50xf32>
    %33 = arith.divf %31, %32 : vector<2x50xf32>
    %c0_18 = arith.constant 0 : index
    %c0_19 = arith.constant 0 : index
    %34 = vector.load %arg8[%c0_18, %c0_19] : memref<50x25xbf16, #tpu.memory_space<vmem>>, vector<50x25xbf16>
    %35 = arith.extf %34 : vector<50x25xbf16> to vector<50x25xf32>
    %cst_20 = arith.constant dense<0.000000e+00> : vector<2x25xf32>
    %36 = tpu.matmul %33, %35, %cst_20 {dimension_numbers = #tpu.dot_dimension_numbers<[1], [0], [0], [1], [0, 0, 1, 1], [], []>} : vector<2x50xf32>, vector<50x25xf32>, vector<2x25xf32> -> vector<2x25xf32>
    %c0_21 = arith.constant 0 : index
    %c0_22 = arith.constant 0 : index
    %37 = vector.load %arg9[%c0_21, %c0_22] : memref<1x25xf32, #tpu.memory_space<vmem>>, vector<1x25xf32>
    %38 = vector.broadcast %37 : vector<1x25xf32> to vector<2x25xf32>
    %39 = arith.addf %36, %38 : vector<2x25xf32>
    %40 = arith.negf %39 : vector<2x25xf32>
    %41 = math.exp %40 : vector<2x25xf32>
    %cst_23 = arith.constant 1.000000e+00 : f32
    %42 = vector.broadcast %cst_23 : f32 to vector<2x25xf32>
    %43 = arith.addf %42, %41 : vector<2x25xf32>
    %44 = arith.divf %42, %43 : vector<2x25xf32>
    %c0_24 = arith.constant 0 : index
    %c0_25 = arith.constant 0 : index
    %45 = vector.load %arg10[%c0_24, %c0_25] : memref<25x128xbf16, #tpu.memory_space<vmem>>, vector<25x128xbf16>
    %46 = arith.extf %45 : vector<25x128xbf16> to vector<25x128xf32>
    %cst_26 = arith.constant dense<0.000000e+00> : vector<2x128xf32>
    %47 = tpu.matmul %44, %46, %cst_26 {dimension_numbers = #tpu.dot_dimension_numbers<[1], [0], [0], [1], [0, 0, 1, 1], [], []>} : vector<2x25xf32>, vector<25x128xf32>, vector<2x128xf32> -> vector<2x128xf32>
    %c0_27 = arith.constant 0 : index
    %c0_28 = arith.constant 0 : index
    %48 = vector.load %arg11[%c0_27, %c0_28] : memref<1x128xf32, #tpu.memory_space<vmem>>, vector<1x128xf32>
    %49 = vector.broadcast %48 : vector<1x128xf32> to vector<2x128xf32>
    %50 = arith.addf %47, %49 : vector<2x128xf32>
    %c0_29 = arith.constant 0 : index
    %c0_30 = arith.constant 0 : index
    %51 = vector.load %arg12[%c0_29, %c0_30] : memref<2x128xf32, #tpu.memory_space<vmem>>, vector<2x128xf32>
    tpu.vector_store %arg12[%c0_29, %c0_30], %50 {strides = array<i32>} : memref<2x128xf32, #tpu.memory_space<vmem>>, vector<2x128xf32>,
    return
  }
  func.func @transform_0(%arg0: i32) -> (i32, i32) {
    %c0_i32 = arith.constant 0 : i32
    %c0_i32_0 = arith.constant 0 : i32
    return %arg0, %c0_i32 : i32, i32
  }
  func.func @transform_1(%arg0: i32) -> (i32, i32) {
    %c0_i32 = arith.constant 0 : i32
    %c0_i32_0 = arith.constant 0 : i32
    %c0_i32_1 = arith.constant 0 : i32
    return %c0_i32, %c0_i32_0 : i32, i32
  }
  func.func @transform_2(%arg0: i32) -> (i32, i32) {
    %c0_i32 = arith.constant 0 : i32
    %c0_i32_0 = arith.constant 0 : i32
    %c0_i32_1 = arith.constant 0 : i32
    return %c0_i32, %c0_i32_0 : i32, i32
  }
  func.func @transform_3(%arg0: i32) -> (i32, i32) {
    %c0_i32 = arith.constant 0 : i32
    %c0_i32_0 = arith.constant 0 : i32
    %c0_i32_1 = arith.constant 0 : i32
    return %c0_i32, %c0_i32_0 : i32, i32
  }
  func.func @transform_4(%arg0: i32) -> (i32, i32) {
    %c0_i32 = arith.constant 0 : i32
    %c0_i32_0 = arith.constant 0 : i32
    %c0_i32_1 = arith.constant 0 : i32
    return %c0_i32, %c0_i32_0 : i32, i32
  }
  func.func @transform_5(%arg0: i32) -> (i32, i32) {
    %c0_i32 = arith.constant 0 : i32
    %c0_i32_0 = arith.constant 0 : i32
    %c0_i32_1 = arith.constant 0 : i32
    return %c0_i32, %c0_i32_0 : i32, i32
  }
  func.func @transform_6(%arg0: i32) -> (i32, i32) {
    %c0_i32 = arith.constant 0 : i32
    %c0_i32_0 = arith.constant 0 : i32
    %c0_i32_1 = arith.constant 0 : i32
    return %c0_i32, %c0_i32_0 : i32, i32
  }
  func.func @transform_7(%arg0: i32) -> (i32, i32) {
    %c0_i32 = arith.constant 0 : i32
    %c0_i32_0 = arith.constant 0 : i32
    %c0_i32_1 = arith.constant 0 : i32
    return %c0_i32, %c0_i32_0 : i32, i32
  }
  func.func @transform_8(%arg0: i32) -> (i32, i32) {
    %c0_i32 = arith.constant 0 : i32
    %c0_i32_0 = arith.constant 0 : i32
    %c0_i32_1 = arith.constant 0 : i32
    return %c0_i32, %c0_i32_0 : i32, i32
  }
  func.func @transform_9(%arg0: i32) -> (i32, i32) {
    %c0_i32 = arith.constant 0 : i32
    %c0_i32_0 = arith.constant 0 : i32
    %c0_i32_1 = arith.constant 0 : i32
    return %c0_i32, %c0_i32_0 : i32, i32
  }
  func.func @transform_10(%arg0: i32) -> (i32, i32) {
    %c0_i32 = arith.constant 0 : i32
    %c0_i32_0 = arith.constant 0 : i32
    %c0_i32_1 = arith.constant 0 : i32
    return %c0_i32, %c0_i32_0 : i32, i32
  }
  func.func @transform_11(%arg0: i32) -> (i32, i32) {
    %c0_i32 = arith.constant 0 : i32
    %c0_i32_0 = arith.constant 0 : i32
    return %arg0, %c0_i32 : i32, i32
  }
}

</mosaic_0001>

<llo_original>
// kernel: tpu_custom_call.1
$region0: #{tpu_custom_call.1}
  #allocation0 [shape = 'u32[]', space=smem, size = 0x4, offset = 0x4, fixed_abs, tag = 'smem constant byte address 0x4 - core index']
  #allocation1 [shape = 'u32[144,128]{1,0:T(1,128)}', space=vmem, size = 0x12000, scoped, tag = 'internal scratch']
  %s0 = inlined_call_operand.vmem [shape: f32[2,42], index: 0, kind: input, shape index: {}]
  %s1 = inlined_call_operand.vmem [shape: bf16[42,300], index: 1, kind: input, shape index: {}]
  %s2 = inlined_call_operand.vmem [shape: f32[1,300], index: 2, kind: input, shape index: {}]
  %s3 = inlined_call_operand.hbm [shape: bf16[300,500], index: 3, kind: input, shape index: {}]
  %s4 = inlined_call_operand.vmem [shape: f32[1,500], index: 4, kind: input, shape index: {}]
  %s5 = inlined_call_operand.vmem [shape: bf16[500,50], index: 5, kind: input, shape index: {}]
  %s6 = inlined_call_operand.vmem [shape: f32[1,50], index: 6, kind: input, shape index: {}]
  %s7 = inlined_call_operand.vmem [shape: bf16[50,25], index: 7, kind: input, shape index: {}]
  %s8 = inlined_call_operand.vmem [shape: f32[1,25], index: 8, kind: input, shape index: {}]
  %s9 = inlined_call_operand.vmem [shape: bf16[25,128], index: 9, kind: input, shape index: {}]
  %s10 = inlined_call_operand.vmem [shape: f32[1,128], index: 10, kind: input, shape index: {}]
  %s11 = inlined_call_operand.hbm [shape: f32[2,128], index: 11, kind: output, shape index: {}]
  %s12 = sld [smem:[#allocation0]]
  $region58: #{tpu_custom_call.1} parent=0
    _
  %s14 = ssub.s32 1, %s12
  %s15 = scalar_select 0, %s14, %s12
  $region1: #{tpu_custom_call.1} parent=0
    #allocation2 [shape = 'u8[311296]{0}', space=vmem, size = 0x4c000, scoped, tag = 'input window, operand 3, single buffered']
    #allocation3 [shape = 's32[1]{0}', space=sflag, size = 0x4, scoped, tag = 'scoped memory for tpu_custom_call.1']
    #allocation4 [shape = 's32[1]{0}', space=sflag, size = 0x4, scoped, tag = 'scoped memory for tpu_custom_call.1']
    #allocation5 [shape = 'u8[1024]{0}', space=vmem, size = 0x400, scoped, tag = 'output window, operand 0, single buffered']
    %16 = vsyncpa [#allocation3], 0
    %17 = vsyncpa [#allocation4], 0
    // Predicated region
    $region2: #{tpu_custom_call.1} parent=1 // pred_check
      _
    $region3: #{tpu_custom_call.1} parent=1 // pred_check_branch
      %19 = sbr.rel (0) target = $region5
    $region4: #{tpu_custom_call.1} parent=1 // pred_region
      _
    $region5: #{tpu_custom_call.1} parent=1 // pred_fallthru
      _
    // Predicated region
    $region6: #{tpu_custom_call.1} parent=1 // pred_check
      _
    $region7: #{tpu_custom_call.1} parent=1 // pred_check_branch
      %21 = sbr.rel (0) target = $region9
    $region8: #{tpu_custom_call.1} parent=1 // pred_region
      _
    $region9: #{tpu_custom_call.1} parent=1 // pred_fallthru
      _
    // Predicated region
    $region10: #{tpu_custom_call.1} parent=1 // pred_check
      _
    $region11: #{tpu_custom_call.1} parent=1 // pred_check_branch
      %23 = sbr.rel (0) target = $region13
    $region12: #{tpu_custom_call.1} parent=1 // pred_region
      _
    $region13: #{tpu_custom_call.1} parent=1 // pred_fallthru
      _
    // Predicated region
    $region14: #{tpu_custom_call.1} parent=1 // pred_check
      _
    $region15: #{tpu_custom_call.1} parent=1 // pred_check_branch
      %25 = sbr.rel (0) target = $region17
    $region16: #{tpu_custom_call.1} parent=1 // pred_region
      %s27 = ssub.s32 9728, 9728
      %28 = vsyncadd [#allocation3], %s27
      %s29 = sshll.u32 [#allocation2], 4
      %s30 = int_to_ptr.vmem [resolvable:$true] %s29
      %35 = dma.hbm_to_vmem [thread:$0]  %s3, 9728, %s30, [#allocation3], 256, 256, 16
    $region17: #{tpu_custom_call.1} parent=1 // pred_fallthru
      _
    // Predicated region
    $region18: #{tpu_custom_call.1} parent=1 // pred_check
      _
    $region19: #{tpu_custom_call.1} parent=1 // pred_check_branch
      %37 = sbr.rel (0) target = $region21
    $region20: #{tpu_custom_call.1} parent=1 // pred_region
      _
    $region21: #{tpu_custom_call.1} parent=1 // pred_fallthru
      _
    // Predicated region
    $region22: #{tpu_custom_call.1} parent=1 // pred_check
      _
    $region23: #{tpu_custom_call.1} parent=1 // pred_check_branch
      %39 = sbr.rel (0) target = $region25
    $region24: #{tpu_custom_call.1} parent=1 // pred_region
      _
    $region25: #{tpu_custom_call.1} parent=1 // pred_fallthru
      _
    // Predicated region
    $region26: #{tpu_custom_call.1} parent=1 // pred_check
      _
    $region27: #{tpu_custom_call.1} parent=1 // pred_check_branch
      %41 = sbr.rel (0) target = $region29
    $region28: #{tpu_custom_call.1} parent=1 // pred_region
      _
    $region29: #{tpu_custom_call.1} parent=1 // pred_fallthru
      _
    // Predicated region
    $region30: #{tpu_custom_call.1} parent=1 // pred_check
      _
    $region31: #{tpu_custom_call.1} parent=1 // pred_check_branch
      %43 = sbr.rel (0) target = $region33
    $region32: #{tpu_custom_call.1} parent=1 // pred_region
      _
    $region33: #{tpu_custom_call.1} parent=1 // pred_fallthru
      _
    // Predicated region
    $region34: #{tpu_custom_call.1} parent=1 // pred_check
      _
    $region35: #{tpu_custom_call.1} parent=1 // pred_check_branch
      %45 = sbr.rel (0) target = $region37
    $region36: #{tpu_custom_call.1} parent=1 // pred_region
      _
    $region37: #{tpu_custom_call.1} parent=1 // pred_fallthru
      _
    // Predicated region
    $region38: #{tpu_custom_call.1} parent=1 // pred_check
      _
    $region39: #{tpu_custom_call.1} parent=1 // pred_check_branch
      %47 = sbr.rel (0) target = $region41
    $region40: #{tpu_custom_call.1} parent=1 // pred_region
      _
    $region41: #{tpu_custom_call.1} parent=1 // pred_fallthru
      _
    // Predicated region
    $region42: #{tpu_custom_call.1} parent=1 // pred_check
      _
    $region43: #{tpu_custom_call.1} parent=1 // pred_check_branch
      %49 = sbr.rel (0) target = $region45
    $region44: #{tpu_custom_call.1} parent=1 // pred_region
      _
    $region45: #{tpu_custom_call.1} parent=1 // pred_fallthru
      _
    // Predicated region
    $region46: #{tpu_custom_call.1} parent=1 // pred_check
      _
    $region47: #{tpu_custom_call.1} parent=1 // pred_check_branch
      %51 = sbr.rel (0) target = $region49
    $region48: #{tpu_custom_call.1} parent=1 // pred_region
      %52 = dma.done [#allocation3], 9728
    $region49: #{tpu_custom_call.1} parent=1 // pred_fallthru
      _
    %v53 = vld [vmem:[%s0] sm:$0x3]
    %v54 = vld [vmem:[%s1] sm:$0xff]
    %v55 = vld [vmem:[%s1 + $0x8] sm:$0xf]
    %v56 = vld [vmem:[%s1 + $0xc] sm:$0xff]
    %v57 = vld [vmem:[%s1 + $0x14] sm:$0xf]
    %v58 = vld [vmem:[%s1 + $0x18] sm:$0xff]
    %v59 = vld [vmem:[%s1 + $0x20] sm:$0xf]
    %v60 = vld [vmem:[%s1 + $0x24] sm:$0xff]
    %v61 = vld [vmem:[%s1 + $0x2c] sm:$0xf]
    %v62 = vld [vmem:[%s1 + $0x30] sm:$0xff]
    %v63 = vld [vmem:[%s1 + $0x38] sm:$0xf]
    %v64 = vld [vmem:[%s1 + $0x3c] sm:$0x11]
    %v65 = vld [vmem:[%s1 + $0x44] sm:$0x1]
    %v66 = vunpack.c.l.bf16 %v54
    %v67 = vunpack.c.h.bf16 %v54
    %v68 = vunpack.c.l.bf16 %v55
    %v69 = vunpack.c.l.bf16 %v56
    %v70 = vunpack.c.h.bf16 %v56
    %v71 = vunpack.c.l.bf16 %v57
    %v72 = vunpack.c.l.bf16 %v58
    %v73 = vunpack.c.h.bf16 %v58
    %v74 = vunpack.c.l.bf16 %v59
    %v75 = vunpack.c.l.bf16 %v60
    %v76 = vunpack.c.h.bf16 %v60
    %v77 = vunpack.c.l.bf16 %v61
    %v78 = vunpack.c.l.bf16 %v62
    %v79 = vunpack.c.h.bf16 %v62
    %v80 = vunpack.c.l.bf16 %v63
    %v81 = vunpack.c.l.bf16 %v64
    %v82 = vunpack.c.h.bf16 %v64
    %v83 = vunpack.c.l.bf16 %v65
    %v84 = vld [vmem:[%s2] sm:$0x7]
    %v86 = vlaneseq
    %v87 = vshrl.u32 %v86, 7
    %v88 = vsub.s32 0, %v87
    %v89 = vrot.slane %v84, %v88
    %v90 = vlaneseq
    %v91 = vshrl.u32 %v90, 7
    %v92 = vsub.s32 1, %v91
    %v93 = vrot.slane %v84, %v92
    %v94 = vlaneseq
    %v95 = vshrl.u32 %v94, 7
    %v96 = vsub.s32 2, %v95
    %v97 = vrot.slane %v84, %v96
    %vm101 = vcmask 343040
    %v103 = vsel %vm101, %v53, 0
    %vm105 = vcmask 1041408
    %v107 = vsel %vm105, %v81, 0
    %v110 = vsel %vm105, %v82, 0
    %v113 = vsel %vm105, %v83, 0
    %115 = vmatprep.subr.mxu0 %v67
    %116 = vmatpush1.msra.mxu0 %v66
    %117 = vmatprep.subr.mxu0 %v70
    %118 = vmatpush1.msra.mxu0 %v69
    %119 = vmatprep.subr.mxu0 %v73
    %120 = vmatpush1.msra.mxu0 %v72
    %121 = vmatprep.subr.mxu0 %v76
    %122 = vmatpush1.msra.mxu0 %v75
    %123 = vmatprep.subr.mxu0 %v79
    %124 = vmatpush1.msra.mxu0 %v78
    %125 = vmatprep.subr.mxu0 %v110
    %126 = vmatpush1.msra.mxu0 %v107
    %127 = vmatprep.subr.mxu0 0.0
    %128 = vmatpush1.msra.mxu0 0.0
    %129 = vmatprep.subr.mxu0 0.0
    %130 = vmatpush1.msra.mxu0 0.0
    %131 = vmatprep.subr.mxu0 0.0
    %132 = vmatpush1.msra.mxu0 0.0
    %133 = vmatprep.subr.mxu0 0.0
    %134 = vmatpush1.msra.mxu0 0.0
    %135 = vmatprep.subr.mxu0 0.0
    %136 = vmatpush1.msra.mxu0 0.0
    %137 = vmatprep.subr.mxu0 0.0
    %138 = vmatpush1.msra.mxu0 0.0
    %139 = vmatprep.subr.mxu0 0.0
    %140 = vmatpush1.msra.mxu0 0.0
    %141 = vmatprep.subr.mxu0 0.0
    %142 = vmatpush1.msra.mxu0 0.0
    %143 = vmatprep.subr.mxu0 0.0
    %144 = vmatpush1.msra.mxu0 0.0
    %145 = vmatprep.subr.mxu0 0.0
    %146 = vmatpush1.msra.mxu0 0.0
    %147 = vmatprep.subr.mxu0 0.0
    %148 = vmatpush1.msra.mxu0 0.0
    %149 = vmatprep.subr.mxu0 0.0
    %150 = vmatpush1.msra.mxu0 0.0
    %151 = vmatprep.subr.mxu0 0.0
    %152 = vmatpush1.msra.mxu0 0.0
    %153 = vmatprep.subr.mxu0 0.0
    %154 = vmatpush1.msra.mxu0 0.0
    %155 = vmatprep.subr.mxu0 0.0
    %156 = vmatpush1.msra.mxu0 0.0
    %157 = vmatprep.subr.mxu0 0.0
    %158 = vmatpush1.msra.mxu0 0.0
    %159 = vmatprep.subr.mxu0 0.0
    %160 = vmatpush1.msra.mxu0 0.0
    %161 = vmatprep.subr.mxu0 0.0
    %162 = vmatpush1.msra.mxu0 0.0
    %163 = vmatprep.subr.mxu0 0.0
    %164 = vmatpush1.msra.mxu0 0.0
    %165 = vmatprep.subr.mxu0 0.0
    %166 = vmatpush1.msra.mxu0 0.0
    %167 = vmatprep.subr.mxu0 0.0
    %168 = vmatpush1.msra.mxu0 0.0
    %169 = vmatprep.subr.mxu0 0.0
    %170 = vmatpush1.msra.mxu0 0.0
    %171 = vmatprep.subr.mxu0 0.0
    %172 = vmatpush1.msra.mxu0 0.0
    %173 = vmatprep.subr.mxu0 0.0
    %174 = vmatpush1.msra.mxu0 0.0
    %175 = vmatprep.subr.mxu0 0.0
    %176 = vmatpush1.msra.mxu0 0.0
    %177 = vmatprep.subr.mxu0 0.0
    %178 = vmatpush1.msra.mxu0 0.0
    %179 = vmatprep.mubr.f32.mxu0 0.0
    %180 = vmatmul.mubr.f32.gmra.mrb[0].mxu0 %v103
    %v181 = vpop.f32.mrb[0].mxu0
    %v182 = vadd.f32 %v89, %v181
    %v183 = vpop.f32.mrb[0].mxu0
    %v184 = vadd.f32 %v93, %v183
    %185 = vdwg.mxu0
    %186 = vmatprep.subr.mxu0 0.0
    %187 = vmatpush1.msra.mxu0 %v68
    %188 = vmatprep.subr.mxu0 0.0
    %189 = vmatpush1.msra.mxu0 %v71
    %190 = vmatprep.subr.mxu0 0.0
    %191 = vmatpush1.msra.mxu0 %v74
    %192 = vmatprep.subr.mxu0 0.0
    %193 = vmatpush1.msra.mxu0 %v77
    %194 = vmatprep.subr.mxu0 0.0
    %195 = vmatpush1.msra.mxu0 %v80
    %196 = vmatprep.subr.mxu0 0.0
    %197 = vmatpush1.msra.mxu0 %v113
    %198 = vmatprep.subr.mxu0 0.0
    %199 = vmatpush1.msra.mxu0 0.0
    %200 = vmatprep.subr.mxu0 0.0
    %201 = vmatpush1.msra.mxu0 0.0
    %202 = vmatprep.subr.mxu0 0.0
    %203 = vmatpush1.msra.mxu0 0.0
    %204 = vmatprep.subr.mxu0 0.0
    %205 = vmatpush1.msra.mxu0 0.0
    %206 = vmatprep.subr.mxu0 0.0
    %207 = vmatpush1.msra.mxu0 0.0
    %208 = vmatprep.subr.mxu0 0.0
    %209 = vmatpush1.msra.mxu0 0.0
    %210 = vmatprep.subr.mxu0 0.0
    %211 = vmatpush1.msra.mxu0 0.0
    %212 = vmatprep.subr.mxu0 0.0
    %213 = vmatpush1.msra.mxu0 0.0
    %214 = vmatprep.subr.mxu0 0.0
    %215 = vmatpush1.msra.mxu0 0.0
    %216 = vmatprep.subr.mxu0 0.0
    %217 = vmatpush1.msra.mxu0 0.0
    %218 = vmatprep.subr.mxu0 0.0
    %219 = vmatpush1.msra.mxu0 0.0
    %220 = vmatprep.subr.mxu0 0.0
    %221 = vmatpush1.msra.mxu0 0.0
    %222 = vmatprep.subr.mxu0 0.0
    %223 = vmatpush1.msra.mxu0 0.0
    %224 = vmatprep.subr.mxu0 0.0
    %225 = vmatpush1.msra.mxu0 0.0
    %226 = vmatprep.subr.mxu0 0.0
    %227 = vmatpush1.msra.mxu0 0.0
    %228 = vmatprep.subr.mxu0 0.0
    %229 = vmatpush1.msra.mxu0 0.0
    %230 = vmatprep.subr.mxu0 0.0
    %231 = vmatpush1.msra.mxu0 0.0
    %232 = vmatprep.subr.mxu0 0.0
    %233 = vmatpush1.msra.mxu0 0.0
    %234 = vmatprep.subr.mxu0 0.0
    %235 = vmatpush1.msra.mxu0 0.0
    %236 = vmatprep.subr.mxu0 0.0
    %237 = vmatpush1.msra.mxu0 0.0
    %238 = vmatprep.subr.mxu0 0.0
    %239 = vmatpush1.msra.mxu0 0.0
    %240 = vmatprep.subr.mxu0 0.0
    %241 = vmatpush1.msra.mxu0 0.0
    %242 = vmatprep.subr.mxu0 0.0
    %243 = vmatpush1.msra.mxu0 0.0
    %244 = vmatprep.subr.mxu0 0.0
    %245 = vmatpush1.msra.mxu0 0.0
    %246 = vmatprep.subr.mxu0 0.0
    %247 = vmatpush1.msra.mxu0 0.0
    %248 = vmatprep.subr.mxu0 0.0
    %249 = vmatpush1.msra.mxu0 0.0
    %250 = vmatprep.mubr.f32.mxu0 0.0
    %251 = vmatmul.mubr.f32.gmra.mrb[0].mxu0 %v103
    %v252 = vpop.f32.mrb[0].mxu0
    %v253 = vadd.f32 %v97, %v252
    %v254 = vpop.f32.mrb[0].mxu0
    %255 = vdwg.mxu0
    %v256 = vxor.u32 %v182, 2147483648
    %v257 = vxor.u32 %v184, 2147483648
    %v258 = vxor.u32 %v253, 2147483648
    %v259 = vmul.f32 %v256, 1.442695
    %v260 = vpow.pop %v259
    %v261 = vmul.f32 %v257, 1.442695
    %v262 = vpow.pop %v261
    %v263 = vmul.f32 %v258, 1.442695
    %v264 = vpow.pop %v263
    %v265 = vadd.f32 %v260, 1.0
    %v266 = vadd.f32 %v262, 1.0
    %v267 = vadd.f32 %v264, 1.0
    %v268 = vrcp.pop %v265
    %v269 = vmul.f32 1.0, %v268
    %v270 = vrcp.pop %v266
    %v271 = vmul.f32 1.0, %v270
    %v272 = vrcp.pop %v267
    %v273 = vmul.f32 1.0, %v272
    %v274 = vld [vmem:[#allocation2] sm:$0xff]
    %v275 = vld [vmem:[#allocation2 + $0x8] sm:$0xff]
    %v276 = vld [vmem:[#allocation2 + $0x10] sm:$0xff]
    %v277 = vld [vmem:[#allocation2 + $0x18] sm:$0xff]
    %v278 = vld [vmem:[#allocation2 + $0x20] sm:$0xff]
    %v279 = vld [vmem:[#allocation2 + $0x28] sm:$0xff]
    %v280 = vld [vmem:[#allocation2 + $0x30] sm:$0xff]
    %v281 = vld [vmem:[#allocation2 + $0x38] sm:$0xff]
    %v282 = vld [vmem:[#allocation2 + $0x40] sm:$0xff]
    %v283 = vld [vmem:[#allocation2 + $0x48] sm:$0xff]
    %v284 = vld [vmem:[#allocation2 + $0x50] sm:$0xff]
    %v285 = vld [vmem:[#allocation2 + $0x58] sm:$0xff]
    %v286 = vld [vmem:[#allocation2 + $0x60] sm:$0xff]
    %v287 = vld [vmem:[#allocation2 + $0x68] sm:$0xff]
    %v288 = vld [vmem:[#allocation2 + $0x70] sm:$0xff]
    %v289 = vld [vmem:[#allocation2 + $0x78] sm:$0xff]
    %v290 = vld [vmem:[#allocation2 + $0x80] sm:$0xff]
    %v291 = vld [vmem:[#allocation2 + $0x88] sm:$0xff]
    %v292 = vld [vmem:[#allocation2 + $0x90] sm:$0xff]
    %v293 = vld [vmem:[#allocation2 + $0x98] sm:$0xff]
    %v294 = vld [vmem:[#allocation2 + $0xa0] sm:$0xff]
    %v295 = vld [vmem:[#allocation2 + $0xa8] sm:$0xff]
    %v296 = vld [vmem:[#allocation2 + $0xb0] sm:$0xff]
    %v297 = vld [vmem:[#allocation2 + $0xb8] sm:$0xff]
    %v298 = vld [vmem:[#allocation2 + $0xc0] sm:$0xff]
    %v299 = vld [vmem:[#allocation2 + $0xc8] sm:$0xff]
    %v300 = vld [vmem:[#allocation2 + $0xd0] sm:$0xff]
    %v301 = vld [vmem:[#allocation2 + $0xd8] sm:$0xff]
    %v302 = vld [vmem:[#allocation2 + $0xe0] sm:$0xff]
    %v303 = vld [vmem:[#allocation2 + $0xe8] sm:$0xff]
    %v304 = vld [vmem:[#allocation2 + $0xf0] sm:$0xff]
    %v305 = vld [vmem:[#allocation2 + $0xf8] sm:$0xff]
    %v306 = vld [vmem:[#allocation2 + $0x100] sm:$0xff]
    %v307 = vld [vmem:[#allocation2 + $0x108] sm:$0xff]
    %v308 = vld [vmem:[#allocation2 + $0x110] sm:$0xff]
    %v309 = vld [vmem:[#allocation2 + $0x118] sm:$0xff]
    %v310 = vld [vmem:[#allocation2 + $0x120] sm:$0xff]
    %v311 = vld [vmem:[#allocation2 + $0x128] sm:$0xff]
    %v312 = vld [vmem:[#allocation2 + $0x130] sm:$0xff]
    %v313 = vld [vmem:[#allocation2 + $0x138] sm:$0xff]
    %v314 = vld [vmem:[#allocation2 + $0x140] sm:$0xff]
    %v315 = vld [vmem:[#allocation2 + $0x148] sm:$0xff]
    %v316 = vld [vmem:[#allocation2 + $0x150] sm:$0xff]
    %v317 = vld [vmem:[#allocation2 + $0x158] sm:$0xff]
    %v318 = vld [vmem:[#allocation2 + $0x160] sm:$0xff]
    %v319 = vld [vmem:[#allocation2 + $0x168] sm:$0xff]
    %v320 = vld [vmem:[#allocation2 + $0x170] sm:$0xff]
    %v321 = vld [vmem:[#allocation2 + $0x178] sm:$0xff]
    %v322 = vld [vmem:[#allocation2 + $0x180] sm:$0xff]
    %v323 = vld [vmem:[#allocation2 + $0x188] sm:$0xff]
    %v324 = vld [vmem:[#allocation2 + $0x190] sm:$0xff]
    %v325 = vld [vmem:[#allocation2 + $0x198] sm:$0xff]
    %v326 = vld [vmem:[#allocation2 + $0x1a0] sm:$0xff]
    %v327 = vld [vmem:[#allocation2 + $0x1a8] sm:$0xff]
    %v328 = vld [vmem:[#allocation2 + $0x1b0] sm:$0xff]
    %v329 = vld [vmem:[#allocation2 + $0x1b8] sm:$0xff]
    %v330 = vld [vmem:[#allocation2 + $0x1c0] sm:$0xff]
    %v331 = vld [vmem:[#allocation2 + $0x1c8] sm:$0xff]
    %v332 = vld [vmem:[#allocation2 + $0x1d0] sm:$0xff]
    %v333 = vld [vmem:[#allocation2 + $0x1d8] sm:$0xff]
    %v334 = vld [vmem:[#allocation2 + $0x1e0] sm:$0xff]
    %v335 = vld [vmem:[#allocation2 + $0x1e8] sm:$0xff]
    %v336 = vld [vmem:[#allocation2 + $0x1f0] sm:$0xff]
    %v337 = vld [vmem:[#allocation2 + $0x1f8] sm:$0xff]
    %v338 = vld [vmem:[#allocation2 + $0x200] sm:$0xff]
    %v339 = vld [vmem:[#allocation2 + $0x208] sm:$0xff]
    %v340 = vld [vmem:[#allocation2 + $0x210] sm:$0xff]
    %v341 = vld [vmem:[#allocation2 + $0x218] sm:$0xff]
    %v342 = vld [vmem:[#allocation2 + $0x220] sm:$0xff]
    %v343 = vld [vmem:[#allocation2 + $0x228] sm:$0xff]
    %v344 = vld [vmem:[#allocation2 + $0x230] sm:$0xff]
    %v345 = vld [vmem:[#allocation2 + $0x238] sm:$0xff]
    %v346 = vld [vmem:[#allocation2 + $0x240] sm:$0xff]
    %v347 = vld [vmem:[#allocation2 + $0x248] sm:$0xff]
    %v348 = vld [vmem:[#allocation2 + $0x250] sm:$0x33]
    %v349 = vld [vmem:[#allocation2 + $0x258] sm:$0x33]
    %v350 = vunpack.c.l.bf16 %v274
    %v351 = vunpack.c.h.bf16 %v274
    %v352 = vunpack.c.l.bf16 %v275
    %v353 = vunpack.c.h.bf16 %v275
    %v354 = vunpack.c.l.bf16 %v276
    %v355 = vunpack.c.h.bf16 %v276
    %v356 = vunpack.c.l.bf16 %v277
    %v357 = vunpack.c.h.bf16 %v277
    %v358 = vunpack.c.l.bf16 %v278
    %v359 = vunpack.c.h.bf16 %v278
    %v360 = vunpack.c.l.bf16 %v279
    %v361 = vunpack.c.h.bf16 %v279
    %v362 = vunpack.c.l.bf16 %v280
    %v363 = vunpack.c.h.bf16 %v280
    %v364 = vunpack.c.l.bf16 %v281
    %v365 = vunpack.c.h.bf16 %v281
    %v366 = vunpack.c.l.bf16 %v282
    %v367 = vunpack.c.h.bf16 %v282
    %v368 = vunpack.c.l.bf16 %v283
    %v369 = vunpack.c.h.bf16 %v283
    %v370 = vunpack.c.l.bf16 %v284
    %v371 = vunpack.c.h.bf16 %v284
    %v372 = vunpack.c.l.bf16 %v285
    %v373 = vunpack.c.h.bf16 %v285
    %v374 = vunpack.c.l.bf16 %v286
    %v375 = vunpack.c.h.bf16 %v286
    %v376 = vunpack.c.l.bf16 %v287
    %v377 = vunpack.c.h.bf16 %v287
    %v378 = vunpack.c.l.bf16 %v288
    %v379 = vunpack.c.h.bf16 %v288
    %v380 = vunpack.c.l.bf16 %v289
    %v381 = vunpack.c.h.bf16 %v289
    %v382 = vunpack.c.l.bf16 %v290
    %v383 = vunpack.c.h.bf16 %v290
    %v384 = vunpack.c.l.bf16 %v291
    %v385 = vunpack.c.h.bf16 %v291
    %v386 = vunpack.c.l.bf16 %v292
    %v387 = vunpack.c.h.bf16 %v292
    %v388 = vunpack.c.l.bf16 %v293
    %v389 = vunpack.c.h.bf16 %v293
    %v390 = vunpack.c.l.bf16 %v294
    %v391 = vunpack.c.h.bf16 %v294
    %v392 = vunpack.c.l.bf16 %v295
    %v393 = vunpack.c.h.bf16 %v295
    %v394 = vunpack.c.l.bf16 %v296
    %v395 = vunpack.c.h.bf16 %v296
    %v396 = vunpack.c.l.bf16 %v297
    %v397 = vunpack.c.h.bf16 %v297
    %v398 = vunpack.c.l.bf16 %v298
    %v399 = vunpack.c.h.bf16 %v298
    %v400 = vunpack.c.l.bf16 %v299
    %v401 = vunpack.c.h.bf16 %v299
    %v402 = vunpack.c.l.bf16 %v300
    %v403 = vunpack.c.h.bf16 %v300
    %v404 = vunpack.c.l.bf16 %v301
    %v405 = vunpack.c.h.bf16 %v301
    %v406 = vunpack.c.l.bf16 %v302
    %v407 = vunpack.c.h.bf16 %v302
    %v408 = vunpack.c.l.bf16 %v303
    %v409 = vunpack.c.h.bf16 %v303
    %v410 = vunpack.c.l.bf16 %v304
    %v411 = vunpack.c.h.bf16 %v304
    %v412 = vunpack.c.l.bf16 %v305
    %v413 = vunpack.c.h.bf16 %v305
    %v414 = vunpack.c.l.bf16 %v306
    %v415 = vunpack.c.h.bf16 %v306
    %v416 = vunpack.c.l.bf16 %v307
    %v417 = vunpack.c.h.bf16 %v307
    %v418 = vunpack.c.l.bf16 %v308
    %v419 = vunpack.c.h.bf16 %v308
    %v420 = vunpack.c.l.bf16 %v309
    %v421 = vunpack.c.h.bf16 %v309
    %v422 = vunpack.c.l.bf16 %v310
    %v423 = vunpack.c.h.bf16 %v310
    %v424 = vunpack.c.l.bf16 %v311
    %v425 = vunpack.c.h.bf16 %v311
    %v426 = vunpack.c.l.bf16 %v312
    %v427 = vunpack.c.h.bf16 %v312
    %v428 = vunpack.c.l.bf16 %v313
    %v429 = vunpack.c.h.bf16 %v313
    %v430 = vunpack.c.l.bf16 %v314
    %v431 = vunpack.c.h.bf16 %v314
    %v432 = vunpack.c.l.bf16 %v315
    %v433 = vunpack.c.h.bf16 %v315
    %v434 = vunpack.c.l.bf16 %v316
    %v435 = vunpack.c.h.bf16 %v316
    %v436 = vunpack.c.l.bf16 %v317
    %v437 = vunpack.c.h.bf16 %v317
    %v438 = vunpack.c.l.bf16 %v318
    %v439 = vunpack.c.h.bf16 %v318
    %v440 = vunpack.c.l.bf16 %v319
    %v441 = vunpack.c.h.bf16 %v319
    %v442 = vunpack.c.l.bf16 %v320
    %v443 = vunpack.c.h.bf16 %v320
    %v444 = vunpack.c.l.bf16 %v321
    %v445 = vunpack.c.h.bf16 %v321
    %v446 = vunpack.c.l.bf16 %v322
    %v447 = vunpack.c.h.bf16 %v322
    %v448 = vunpack.c.l.bf16 %v323
    %v449 = vunpack.c.h.bf16 %v323
    %v450 = vunpack.c.l.bf16 %v324
    %v451 = vunpack.c.h.bf16 %v324
    %v452 = vunpack.c.l.bf16 %v325
    %v453 = vunpack.c.h.bf16 %v325
    %v454 = vunpack.c.l.bf16 %v326
    %v455 = vunpack.c.h.bf16 %v326
    %v456 = vunpack.c.l.bf16 %v327
    %v457 = vunpack.c.h.bf16 %v327
    %v458 = vunpack.c.l.bf16 %v328
    %v459 = vunpack.c.h.bf16 %v328
    %v460 = vunpack.c.l.bf16 %v329
    %v461 = vunpack.c.h.bf16 %v329
    %v462 = vunpack.c.l.bf16 %v330
    %v463 = vunpack.c.h.bf16 %v330
    %v464 = vunpack.c.l.bf16 %v331
    %v465 = vunpack.c.h.bf16 %v331
    %v466 = vunpack.c.l.bf16 %v332
    %v467 = vunpack.c.h.bf16 %v332
    %v468 = vunpack.c.l.bf16 %v333
    %v469 = vunpack.c.h.bf16 %v333
    %v470 = vunpack.c.l.bf16 %v334
    %v471 = vunpack.c.h.bf16 %v334
    %v472 = vunpack.c.l.bf16 %v335
    %v473 = vunpack.c.h.bf16 %v335
    %v474 = vunpack.c.l.bf16 %v336
    %v475 = vunpack.c.h.bf16 %v336
    %v476 = vunpack.c.l.bf16 %v337
    %v477 = vunpack.c.h.bf16 %v337
    %v478 = vunpack.c.l.bf16 %v338
    %v479 = vunpack.c.h.bf16 %v338
    %v480 = vunpack.c.l.bf16 %v339
    %v481 = vunpack.c.h.bf16 %v339
    %v482 = vunpack.c.l.bf16 %v340
    %v483 = vunpack.c.h.bf16 %v340
    %v484 = vunpack.c.l.bf16 %v341
    %v485 = vunpack.c.h.bf16 %v341
    %v486 = vunpack.c.l.bf16 %v342
    %v487 = vunpack.c.h.bf16 %v342
    %v488 = vunpack.c.l.bf16 %v343
    %v489 = vunpack.c.h.bf16 %v343
    %v490 = vunpack.c.l.bf16 %v344
    %v491 = vunpack.c.h.bf16 %v344
    %v492 = vunpack.c.l.bf16 %v345
    %v493 = vunpack.c.h.bf16 %v345
    %v494 = vunpack.c.l.bf16 %v346
    %v495 = vunpack.c.h.bf16 %v346
    %v496 = vunpack.c.l.bf16 %v347
    %v497 = vunpack.c.h.bf16 %v347
    %v498 = vunpack.c.l.bf16 %v348
    %v499 = vunpack.c.h.bf16 %v348
    %v500 = vunpack.c.l.bf16 %v349
    %v501 = vunpack.c.h.bf16 %v349
    %v502 = vld [vmem:[%s4] sm:$0xf]
    %v504 = vlaneseq
    %v505 = vshrl.u32 %v504, 7
    %v506 = vsub.s32 0, %v505
    %v507 = vrot.slane %v502, %v506
    %v508 = vlaneseq
    %v509 = vshrl.u32 %v508, 7
    %v510 = vsub.s32 1, %v509
    %v511 = vrot.slane %v502, %v510
    %v512 = vlaneseq
    %v513 = vshrl.u32 %v512, 7
    %v514 = vsub.s32 2, %v513
    %v515 = vrot.slane %v502, %v514
    %v516 = vlaneseq
    %v517 = vshrl.u32 %v516, 7
    %v518 = vsub.s32 3, %v517
    %v519 = vrot.slane %v502, %v518
    %vm524 = vcmask 359424
    %v526 = vsel %vm524, %v273, 0
    %vm528 = vcmask 1043456
    %v530 = vsel %vm528, %v498, 0
    %v533 = vsel %vm528, %v499, 0
    %v536 = vsel %vm528, %v500, 0
    %v539 = vsel %vm528, %v501, 0
    %541 = vmatprep.subr.mxu0 %v351
    %542 = vmatpush1.msra.mxu0 %v350
    %543 = vmatprep.subr.mxu0 %v355
    %544 = vmatpush1.msra.mxu0 %v354
    %545 = vmatprep.subr.mxu0 %v359
    %546 = vmatpush1.msra.mxu0 %v358
    %547 = vmatprep.subr.mxu0 %v363
    %548 = vmatpush1.msra.mxu0 %v362
    %549 = vmatprep.subr.mxu0 %v367
    %550 = vmatpush1.msra.mxu0 %v366
    %551 = vmatprep.subr.mxu0 %v371
    %552 = vmatpush1.msra.mxu0 %v370
    %553 = vmatprep.subr.mxu0 %v375
    %554 = vmatpush1.msra.mxu0 %v374
    %555 = vmatprep.subr.mxu0 %v379
    %556 = vmatpush1.msra.mxu0 %v378
    %557 = vmatprep.subr.mxu0 %v383
    %558 = vmatpush1.msra.mxu0 %v382
    %559 = vmatprep.subr.mxu0 %v387
    %560 = vmatpush1.msra.mxu0 %v386
    %561 = vmatprep.subr.mxu0 %v391
    %562 = vmatpush1.msra.mxu0 %v390
    %563 = vmatprep.subr.mxu0 %v395
    %564 = vmatpush1.msra.mxu0 %v394
    %565 = vmatprep.subr.mxu0 %v399
    %566 = vmatpush1.msra.mxu0 %v398
    %567 = vmatprep.subr.mxu0 %v403
    %568 = vmatpush1.msra.mxu0 %v402
    %569 = vmatprep.subr.mxu0 %v407
    %570 = vmatpush1.msra.mxu0 %v406
    %571 = vmatprep.subr.mxu0 %v411
    %572 = vmatpush1.msra.mxu0 %v410
    %573 = vmatprep.subr.mxu0 %v415
    %574 = vmatpush1.msra.mxu0 %v414
    %575 = vmatprep.subr.mxu0 %v419
    %576 = vmatpush1.msra.mxu0 %v418
    %577 = vmatprep.subr.mxu0 %v423
    %578 = vmatpush1.msra.mxu0 %v422
    %579 = vmatprep.subr.mxu0 %v427
    %580 = vmatpush1.msra.mxu0 %v426
    %581 = vmatprep.subr.mxu0 %v431
    %582 = vmatpush1.msra.mxu0 %v430
    %583 = vmatprep.subr.mxu0 %v435
    %584 = vmatpush1.msra.mxu0 %v434
    %585 = vmatprep.subr.mxu0 %v439
    %586 = vmatpush1.msra.mxu0 %v438
    %587 = vmatprep.subr.mxu0 %v443
    %588 = vmatpush1.msra.mxu0 %v442
    %589 = vmatprep.subr.mxu0 %v447
    %590 = vmatpush1.msra.mxu0 %v446
    %591 = vmatprep.subr.mxu0 %v451
    %592 = vmatpush1.msra.mxu0 %v450
    %593 = vmatprep.subr.mxu0 %v455
    %594 = vmatpush1.msra.mxu0 %v454
    %595 = vmatprep.subr.mxu0 %v459
    %596 = vmatpush1.msra.mxu0 %v458
    %597 = vmatprep.subr.mxu0 %v463
    %598 = vmatpush1.msra.mxu0 %v462
    %599 = vmatprep.subr.mxu0 %v467
    %600 = vmatpush1.msra.mxu0 %v466
    %601 = vmatprep.subr.mxu0 %v471
    %602 = vmatpush1.msra.mxu0 %v470
    %603 = vmatprep.subr.mxu0 %v475
    %604 = vmatpush1.msra.mxu0 %v474
    %605 = vmatprep.mubr.f32.mxu0 %v271
    %606 = vmatmul.mubr.f32.gmra.mrb[0].mxu0 %v269
    %v607 = vpop.f32.mrb[0].mxu0
    %v608 = vadd.f32 %v507, %v607
    %v609 = vpop.f32.mrb[0].mxu0
    %v610 = vadd.f32 %v511, %v609
    %611 = vdwg.mxu0
    %612 = vmatprep.subr.mxu0 %v479
    %613 = vmatpush1.msra.mxu0 %v478
    %614 = vmatprep.subr.mxu0 %v483
    %615 = vmatpush1.msra.mxu0 %v482
    %616 = vmatprep.subr.mxu0 %v487
    %617 = vmatpush1.msra.mxu0 %v486
    %618 = vmatprep.subr.mxu0 %v491
    %619 = vmatpush1.msra.mxu0 %v490
    %620 = vmatprep.subr.mxu0 %v495
    %621 = vmatpush1.msra.mxu0 %v494
    %622 = vmatprep.subr.mxu0 %v533
    %623 = vmatpush1.msra.mxu0 %v530
    %624 = vmatprep.subr.mxu0 0.0
    %625 = vmatpush1.msra.mxu0 0.0
    %626 = vmatprep.subr.mxu0 0.0
    %627 = vmatpush1.msra.mxu0 0.0
    %628 = vmatprep.subr.mxu0 0.0
    %629 = vmatpush1.msra.mxu0 0.0
    %630 = vmatprep.subr.mxu0 0.0
    %631 = vmatpush1.msra.mxu0 0.0
    %632 = vmatprep.subr.mxu0 0.0
    %633 = vmatpush1.msra.mxu0 0.0
    %634 = vmatprep.subr.mxu0 0.0
    %635 = vmatpush1.msra.mxu0 0.0
    %636 = vmatprep.subr.mxu0 0.0
    %637 = vmatpush1.msra.mxu0 0.0
    %638 = vmatprep.subr.mxu0 0.0
    %639 = vmatpush1.msra.mxu0 0.0
    %640 = vmatprep.subr.mxu0 0.0
    %641 = vmatpush1.msra.mxu0 0.0
    %642 = vmatprep.subr.mxu0 0.0
    %643 = vmatpush1.msra.mxu0 0.0
    %644 = vmatprep.subr.mxu0 0.0
    %645 = vmatpush1.msra.mxu0 0.0
    %646 = vmatprep.subr.mxu0 0.0
    %647 = vmatpush1.msra.mxu0 0.0
    %648 = vmatprep.subr.mxu0 0.0
    %649 = vmatpush1.msra.mxu0 0.0
    %650 = vmatprep.subr.mxu0 0.0
    %651 = vmatpush1.msra.mxu0 0.0
    %652 = vmatprep.subr.mxu0 0.0
    %653 = vmatpush1.msra.mxu0 0.0
    %654 = vmatprep.subr.mxu0 0.0
    %655 = vmatpush1.msra.mxu0 0.0
    %656 = vmatprep.subr.mxu0 0.0
    %657 = vmatpush1.msra.mxu0 0.0
    %658 = vmatprep.subr.mxu0 0.0
    %659 = vmatpush1.msra.mxu0 0.0
    %660 = vmatprep.subr.mxu0 0.0
    %661 = vmatpush1.msra.mxu0 0.0
    %662 = vmatprep.subr.mxu0 0.0
    %663 = vmatpush1.msra.mxu0 0.0
    %664 = vmatprep.subr.mxu0 0.0
    %665 = vmatpush1.msra.mxu0 0.0
    %666 = vmatprep.subr.mxu0 0.0
    %667 = vmatpush1.msra.mxu0 0.0
    %668 = vmatprep.subr.mxu0 0.0
    %669 = vmatpush1.msra.mxu0 0.0
    %670 = vmatprep.subr.mxu0 0.0
    %671 = vmatpush1.msra.mxu0 0.0
    %672 = vmatprep.subr.mxu0 0.0
    %673 = vmatpush1.msra.mxu0 0.0
    %674 = vmatprep.subr.mxu0 0.0
    %675 = vmatpush1.msra.mxu0 0.0
    %676 = vmatprep.mubr.f32.mxu0 0.0
    %677 = vmatmul.mubr.f32.gmra.mrb[0].mxu0 %v526
    %v678 = vpop.f32.mrb[0].mxu0
    %v679 = vadd.f32 %v608, %v678
    %v680 = vpop.f32.mrb[0].mxu0
    %v681 = vadd.f32 %v610, %v680
    %682 = vdwg.mxu0
    %683 = vmatprep.subr.mxu0 %v353
    %684 = vmatpush1.msra.mxu0 %v352
    %685 = vmatprep.subr.mxu0 %v357
    %686 = vmatpush1.msra.mxu0 %v356
    %687 = vmatprep.subr.mxu0 %v361
    %688 = vmatpush1.msra.mxu0 %v360
    %689 = vmatprep.subr.mxu0 %v365
    %690 = vmatpush1.msra.mxu0 %v364
    %691 = vmatprep.subr.mxu0 %v369
    %692 = vmatpush1.msra.mxu0 %v368
    %693 = vmatprep.subr.mxu0 %v373
    %694 = vmatpush1.msra.mxu0 %v372
    %695 = vmatprep.subr.mxu0 %v377
    %696 = vmatpush1.msra.mxu0 %v376
    %697 = vmatprep.subr.mxu0 %v381
    %698 = vmatpush1.msra.mxu0 %v380
    %699 = vmatprep.subr.mxu0 %v385
    %700 = vmatpush1.msra.mxu0 %v384
    %701 = vmatprep.subr.mxu0 %v389
    %702 = vmatpush1.msra.mxu0 %v388
    %703 = vmatprep.subr.mxu0 %v393
    %704 = vmatpush1.msra.mxu0 %v392
    %705 = vmatprep.subr.mxu0 %v397
    %706 = vmatpush1.msra.mxu0 %v396
    %707 = vmatprep.subr.mxu0 %v401
    %708 = vmatpush1.msra.mxu0 %v400
    %709 = vmatprep.subr.mxu0 %v405
    %710 = vmatpush1.msra.mxu0 %v404
    %711 = vmatprep.subr.mxu0 %v409
    %712 = vmatpush1.msra.mxu0 %v408
    %713 = vmatprep.subr.mxu0 %v413
    %714 = vmatpush1.msra.mxu0 %v412
    %715 = vmatprep.subr.mxu0 %v417
    %716 = vmatpush1.msra.mxu0 %v416
    %717 = vmatprep.subr.mxu0 %v421
    %718 = vmatpush1.msra.mxu0 %v420
    %719 = vmatprep.subr.mxu0 %v425
    %720 = vmatpush1.msra.mxu0 %v424
    %721 = vmatprep.subr.mxu0 %v429
    %722 = vmatpush1.msra.mxu0 %v428
    %723 = vmatprep.subr.mxu0 %v433
    %724 = vmatpush1.msra.mxu0 %v432
    %725 = vmatprep.subr.mxu0 %v437
    %726 = vmatpush1.msra.mxu0 %v436
    %727 = vmatprep.subr.mxu0 %v441
    %728 = vmatpush1.msra.mxu0 %v440
    %729 = vmatprep.subr.mxu0 %v445
    %730 = vmatpush1.msra.mxu0 %v444
    %731 = vmatprep.subr.mxu0 %v449
    %732 = vmatpush1.msra.mxu0 %v448
    %733 = vmatprep.subr.mxu0 %v453
    %734 = vmatpush1.msra.mxu0 %v452
    %735 = vmatprep.subr.mxu0 %v457
    %736 = vmatpush1.msra.mxu0 %v456
    %737 = vmatprep.subr.mxu0 %v461
    %738 = vmatpush1.msra.mxu0 %v460
    %739 = vmatprep.subr.mxu0 %v465
    %740 = vmatpush1.msra.mxu0 %v464
    %741 = vmatprep.subr.mxu0 %v469
    %742 = vmatpush1.msra.mxu0 %v468
    %743 = vmatprep.subr.mxu0 %v473
    %744 = vmatpush1.msra.mxu0 %v472
    %745 = vmatprep.subr.mxu0 %v477
    %746 = vmatpush1.msra.mxu0 %v476
    %747 = vmatprep.mubr.f32.mxu0 %v271
    %748 = vmatmul.mubr.f32.gmra.mrb[0].mxu0 %v269
    %v749 = vpop.f32.mrb[0].mxu0
    %v750 = vadd.f32 %v515, %v749
    %v751 = vpop.f32.mrb[0].mxu0
    %v752 = vadd.f32 %v519, %v751
    %753 = vdwg.mxu0
    %754 = vmatprep.subr.mxu0 %v481
    %755 = vmatpush1.msra.mxu0 %v480
    %756 = vmatprep.subr.mxu0 %v485
    %757 = vmatpush1.msra.mxu0 %v484
    %758 = vmatprep.subr.mxu0 %v489
    %759 = vmatpush1.msra.mxu0 %v488
    %760 = vmatprep.subr.mxu0 %v493
    %761 = vmatpush1.msra.mxu0 %v492
    %762 = vmatprep.subr.mxu0 %v497
    %763 = vmatpush1.msra.mxu0 %v496
    %764 = vmatprep.subr.mxu0 %v539
    %765 = vmatpush1.msra.mxu0 %v536
    %766 = vmatprep.subr.mxu0 0.0
    %767 = vmatpush1.msra.mxu0 0.0
    %768 = vmatprep.subr.mxu0 0.0
    %769 = vmatpush1.msra.mxu0 0.0
    %770 = vmatprep.subr.mxu0 0.0
    %771 = vmatpush1.msra.mxu0 0.0
    %772 = vmatprep.subr.mxu0 0.0
    %773 = vmatpush1.msra.mxu0 0.0
    %774 = vmatprep.subr.mxu0 0.0
    %775 = vmatpush1.msra.mxu0 0.0
    %776 = vmatprep.subr.mxu0 0.0
    %777 = vmatpush1.msra.mxu0 0.0
    %778 = vmatprep.subr.mxu0 0.0
    %779 = vmatpush1.msra.mxu0 0.0
    %780 = vmatprep.subr.mxu0 0.0
    %781 = vmatpush1.msra.mxu0 0.0
    %782 = vmatprep.subr.mxu0 0.0
    %783 = vmatpush1.msra.mxu0 0.0
    %784 = vmatprep.subr.mxu0 0.0
    %785 = vmatpush1.msra.mxu0 0.0
    %786 = vmatprep.subr.mxu0 0.0
    %787 = vmatpush1.msra.mxu0 0.0
    %788 = vmatprep.subr.mxu0 0.0
    %789 = vmatpush1.msra.mxu0 0.0
    %790 = vmatprep.subr.mxu0 0.0
    %791 = vmatpush1.msra.mxu0 0.0
    %792 = vmatprep.subr.mxu0 0.0
    %793 = vmatpush1.msra.mxu0 0.0
    %794 = vmatprep.subr.mxu0 0.0
    %795 = vmatpush1.msra.mxu0 0.0
    %796 = vmatprep.subr.mxu0 0.0
    %797 = vmatpush1.msra.mxu0 0.0
    %798 = vmatprep.subr.mxu0 0.0
    %799 = vmatpush1.msra.mxu0 0.0
    %800 = vmatprep.subr.mxu0 0.0
    %801 = vmatpush1.msra.mxu0 0.0
    %802 = vmatprep.subr.mxu0 0.0
    %803 = vmatpush1.msra.mxu0 0.0
    %804 = vmatprep.subr.mxu0 0.0
    %805 = vmatpush1.msra.mxu0 0.0
    %806 = vmatprep.subr.mxu0 0.0
    %807 = vmatpush1.msra.mxu0 0.0
    %808 = vmatprep.subr.mxu0 0.0
    %809 = vmatpush1.msra.mxu0 0.0
    %810 = vmatprep.subr.mxu0 0.0
    %811 = vmatpush1.msra.mxu0 0.0
    %812 = vmatprep.subr.mxu0 0.0
    %813 = vmatpush1.msra.mxu0 0.0
    %814 = vmatprep.subr.mxu0 0.0
    %815 = vmatpush1.msra.mxu0 0.0
    %816 = vmatprep.subr.mxu0 0.0
    %817 = vmatpush1.msra.mxu0 0.0
    %818 = vmatprep.mubr.f32.mxu0 0.0
    %819 = vmatmul.mubr.f32.gmra.mrb[0].mxu0 %v526
    %v820 = vpop.f32.mrb[0].mxu0
    %v821 = vadd.f32 %v750, %v820
    %v822 = vpop.f32.mrb[0].mxu0
    %v823 = vadd.f32 %v752, %v822
    %824 = vdwg.mxu0
    %v825 = vxor.u32 %v679, 2147483648
    %v826 = vxor.u32 %v681, 2147483648
    %v827 = vxor.u32 %v821, 2147483648
    %v828 = vxor.u32 %v823, 2147483648
    %v829 = vmul.f32 %v825, 1.442695
    %v830 = vpow.pop %v829
    %v831 = vmul.f32 %v826, 1.442695
    %v832 = vpow.pop %v831
    %v833 = vmul.f32 %v827, 1.442695
    %v834 = vpow.pop %v833
    %v835 = vmul.f32 %v828, 1.442695
    %v836 = vpow.pop %v835
    %v837 = vadd.f32 %v830, 1.0
    %v838 = vadd.f32 %v832, 1.0
    %v839 = vadd.f32 %v834, 1.0
    %v840 = vadd.f32 %v836, 1.0
    %v841 = vrcp.pop %v837
    %v842 = vmul.f32 1.0, %v841
    %v843 = vrcp.pop %v838
    %v844 = vmul.f32 1.0, %v843
    %v845 = vrcp.pop %v839
    %v846 = vmul.f32 1.0, %v845
    %v847 = vrcp.pop %v840
    %v848 = vmul.f32 1.0, %v847
    %v849 = vld [vmem:[%s5] sm:$0xf]
    %v850 = vld [vmem:[%s5 + $0x4] sm:$0xf]
    %v851 = vld [vmem:[%s5 + $0x8] sm:$0xf]
    %v852 = vld [vmem:[%s5 + $0xc] sm:$0xf]
    %v853 = vld [vmem:[%s5 + $0x10] sm:$0xf]
    %v854 = vld [vmem:[%s5 + $0x14] sm:$0xf]
    %v855 = vld [vmem:[%s5 + $0x18] sm:$0xf]
    %v856 = vld [vmem:[%s5 + $0x1c] sm:$0xf]
    %v857 = vld [vmem:[%s5 + $0x20] sm:$0xf]
    %v858 = vld [vmem:[%s5 + $0x24] sm:$0xf]
    %v859 = vld [vmem:[%s5 + $0x28] sm:$0xf]
    %v860 = vld [vmem:[%s5 + $0x2c] sm:$0xf]
    %v861 = vld [vmem:[%s5 + $0x30] sm:$0xf]
    %v862 = vld [vmem:[%s5 + $0x34] sm:$0xf]
    %v863 = vld [vmem:[%s5 + $0x38] sm:$0xf]
    %v864 = vld [vmem:[%s5 + $0x3c] sm:$0xf]
    %v865 = vld [vmem:[%s5 + $0x40] sm:$0xf]
    %v866 = vld [vmem:[%s5 + $0x44] sm:$0xf]
    %v867 = vld [vmem:[%s5 + $0x48] sm:$0xf]
    %v868 = vld [vmem:[%s5 + $0x4c] sm:$0xf]
    %v869 = vld [vmem:[%s5 + $0x50] sm:$0xf]
    %v870 = vld [vmem:[%s5 + $0x54] sm:$0xf]
    %v871 = vld [vmem:[%s5 + $0x58] sm:$0xf]
    %v872 = vld [vmem:[%s5 + $0x5c] sm:$0xf]
    %v873 = vld [vmem:[%s5 + $0x60] sm:$0xf]
    %v874 = vld [vmem:[%s5 + $0x64] sm:$0xf]
    %v875 = vld [vmem:[%s5 + $0x68] sm:$0xf]
    %v876 = vld [vmem:[%s5 + $0x6c] sm:$0xf]
    %v877 = vld [vmem:[%s5 + $0x70] sm:$0xf]
    %v878 = vld [vmem:[%s5 + $0x74] sm:$0xf]
    %v879 = vld [vmem:[%s5 + $0x78] sm:$0xf]
    %v880 = vld [vmem:[%s5 + $0x7c] sm:$0xf]
    %v881 = vld [vmem:[%s5 + $0x80] sm:$0xf]
    %v882 = vld [vmem:[%s5 + $0x84] sm:$0xf]
    %v883 = vld [vmem:[%s5 + $0x88] sm:$0xf]
    %v884 = vld [vmem:[%s5 + $0x8c] sm:$0xf]
    %v885 = vld [vmem:[%s5 + $0x90] sm:$0xf]
    %v886 = vld [vmem:[%s5 + $0x94] sm:$0xf]
    %v887 = vld [vmem:[%s5 + $0x98] sm:$0xf]
    %v888 = vld [vmem:[%s5 + $0x9c] sm:$0xf]
    %v889 = vld [vmem:[%s5 + $0xa0] sm:$0xf]
    %v890 = vld [vmem:[%s5 + $0xa4] sm:$0xf]
    %v891 = vld [vmem:[%s5 + $0xa8] sm:$0xf]
    %v892 = vld [vmem:[%s5 + $0xac] sm:$0xf]
    %v893 = vld [vmem:[%s5 + $0xb0] sm:$0xf]
    %v894 = vld [vmem:[%s5 + $0xb4] sm:$0xf]
    %v895 = vld [vmem:[%s5 + $0xb8] sm:$0xf]
    %v896 = vld [vmem:[%s5 + $0xbc] sm:$0xf]
    %v897 = vld [vmem:[%s5 + $0xc0] sm:$0xf]
    %v898 = vld [vmem:[%s5 + $0xc4] sm:$0xf]
    %v899 = vld [vmem:[%s5 + $0xc8] sm:$0xf]
    %v900 = vld [vmem:[%s5 + $0xcc] sm:$0xf]
    %v901 = vld [vmem:[%s5 + $0xd0] sm:$0xf]
    %v902 = vld [vmem:[%s5 + $0xd4] sm:$0xf]
    %v903 = vld [vmem:[%s5 + $0xd8] sm:$0xf]
    %v904 = vld [vmem:[%s5 + $0xdc] sm:$0xf]
    %v905 = vld [vmem:[%s5 + $0xe0] sm:$0xf]
    %v906 = vld [vmem:[%s5 + $0xe4] sm:$0xf]
    %v907 = vld [vmem:[%s5 + $0xe8] sm:$0xf]
    %v908 = vld [vmem:[%s5 + $0xec] sm:$0xf]
    %v909 = vld [vmem:[%s5 + $0xf0] sm:$0xf]
    %v910 = vld [vmem:[%s5 + $0xf4] sm:$0xf]
    %v911 = vld [vmem:[%s5 + $0xf8] sm:$0x3]
    %v912 = vunpack.c.l.bf16 %v849
    %v913 = vunpack.c.l.bf16 %v850
    %v914 = vunpack.c.l.bf16 %v851
    %v915 = vunpack.c.l.bf16 %v852
    %v916 = vunpack.c.l.bf16 %v853
    %v917 = vunpack.c.l.bf16 %v854
    %v918 = vunpack.c.l.bf16 %v855
    %v919 = vunpack.c.l.bf16 %v856
    %v920 = vunpack.c.l.bf16 %v857
    %v921 = vunpack.c.l.bf16 %v858
    %v922 = vunpack.c.l.bf16 %v859
    %v923 = vunpack.c.l.bf16 %v860
    %v924 = vunpack.c.l.bf16 %v861
    %v925 = vunpack.c.l.bf16 %v862
    %v926 = vunpack.c.l.bf16 %v863
    %v927 = vunpack.c.l.bf16 %v864
    %v928 = vunpack.c.l.bf16 %v865
    %v929 = vunpack.c.l.bf16 %v866
    %v930 = vunpack.c.l.bf16 %v867
    %v931 = vunpack.c.l.bf16 %v868
    %v932 = vunpack.c.l.bf16 %v869
    %v933 = vunpack.c.l.bf16 %v870
    %v934 = vunpack.c.l.bf16 %v871
    %v935 = vunpack.c.l.bf16 %v872
    %v936 = vunpack.c.l.bf16 %v873
    %v937 = vunpack.c.l.bf16 %v874
    %v938 = vunpack.c.l.bf16 %v875
    %v939 = vunpack.c.l.bf16 %v876
    %v940 = vunpack.c.l.bf16 %v877
    %v941 = vunpack.c.l.bf16 %v878
    %v942 = vunpack.c.l.bf16 %v879
    %v943 = vunpack.c.l.bf16 %v880
    %v944 = vunpack.c.l.bf16 %v881
    %v945 = vunpack.c.l.bf16 %v882
    %v946 = vunpack.c.l.bf16 %v883
    %v947 = vunpack.c.l.bf16 %v884
    %v948 = vunpack.c.l.bf16 %v885
    %v949 = vunpack.c.l.bf16 %v886
    %v950 = vunpack.c.l.bf16 %v887
    %v951 = vunpack.c.l.bf16 %v888
    %v952 = vunpack.c.l.bf16 %v889
    %v953 = vunpack.c.l.bf16 %v890
    %v954 = vunpack.c.l.bf16 %v891
    %v955 = vunpack.c.l.bf16 %v892
    %v956 = vunpack.c.l.bf16 %v893
    %v957 = vunpack.c.l.bf16 %v894
    %v958 = vunpack.c.l.bf16 %v895
    %v959 = vunpack.c.l.bf16 %v896
    %v960 = vunpack.c.l.bf16 %v897
    %v961 = vunpack.c.l.bf16 %v898
    %v962 = vunpack.c.l.bf16 %v899
    %v963 = vunpack.c.l.bf16 %v900
    %v964 = vunpack.c.l.bf16 %v901
    %v965 = vunpack.c.l.bf16 %v902
    %v966 = vunpack.c.l.bf16 %v903
    %v967 = vunpack.c.l.bf16 %v904
    %v968 = vunpack.c.l.bf16 %v905
    %v969 = vunpack.c.l.bf16 %v906
    %v970 = vunpack.c.l.bf16 %v907
    %v971 = vunpack.c.l.bf16 %v908
    %v972 = vunpack.c.l.bf16 %v909
    %v973 = vunpack.c.l.bf16 %v910
    %v974 = vunpack.c.l.bf16 %v911
    %v975 = vld [vmem:[%s6] sm:$0x1]
    %v977 = vlaneseq
    %v978 = vshrl.u32 %v977, 7
    %v979 = vsub.s32 0, %v978
    %v980 = vrot.slane %v975, %v979
    %vm982 = vcmask 949248
    %v984 = vsel %vm982, %v848, 0
    %v987 = vsel %vm528, %v974, 0
    %989 = vmatprep.subr.mxu0 0.0
    %990 = vmatpush1.msra.mxu0 %v912
    %991 = vmatprep.subr.mxu0 0.0
    %992 = vmatpush1.msra.mxu0 %v913
    %993 = vmatprep.subr.mxu0 0.0
    %994 = vmatpush1.msra.mxu0 %v914
    %995 = vmatprep.subr.mxu0 0.0
    %996 = vmatpush1.msra.mxu0 %v915
    %997 = vmatprep.subr.mxu0 0.0
    %998 = vmatpush1.msra.mxu0 %v916
    %999 = vmatprep.subr.mxu0 0.0
    %1000 = vmatpush1.msra.mxu0 %v917
    %1001 = vmatprep.subr.mxu0 0.0
    %1002 = vmatpush1.msra.mxu0 %v918
    %1003 = vmatprep.subr.mxu0 0.0
    %1004 = vmatpush1.msra.mxu0 %v919
    %1005 = vmatprep.subr.mxu0 0.0
    %1006 = vmatpush1.msra.mxu0 %v920
    %1007 = vmatprep.subr.mxu0 0.0
    %1008 = vmatpush1.msra.mxu0 %v921
    %1009 = vmatprep.subr.mxu0 0.0
    %1010 = vmatpush1.msra.mxu0 %v922
    %1011 = vmatprep.subr.mxu0 0.0
    %1012 = vmatpush1.msra.mxu0 %v923
    %1013 = vmatprep.subr.mxu0 0.0
    %1014 = vmatpush1.msra.mxu0 %v924
    %1015 = vmatprep.subr.mxu0 0.0
    %1016 = vmatpush1.msra.mxu0 %v925
    %1017 = vmatprep.subr.mxu0 0.0
    %1018 = vmatpush1.msra.mxu0 %v926
    %1019 = vmatprep.subr.mxu0 0.0
    %1020 = vmatpush1.msra.mxu0 %v927
    %1021 = vmatprep.subr.mxu0 0.0
    %1022 = vmatpush1.msra.mxu0 %v928
    %1023 = vmatprep.subr.mxu0 0.0
    %1024 = vmatpush1.msra.mxu0 %v929
    %1025 = vmatprep.subr.mxu0 0.0
    %1026 = vmatpush1.msra.mxu0 %v930
    %1027 = vmatprep.subr.mxu0 0.0
    %1028 = vmatpush1.msra.mxu0 %v931
    %1029 = vmatprep.subr.mxu0 0.0
    %1030 = vmatpush1.msra.mxu0 %v932
    %1031 = vmatprep.subr.mxu0 0.0
    %1032 = vmatpush1.msra.mxu0 %v933
    %1033 = vmatprep.subr.mxu0 0.0
    %1034 = vmatpush1.msra.mxu0 %v934
    %1035 = vmatprep.subr.mxu0 0.0
    %1036 = vmatpush1.msra.mxu0 %v935
    %1037 = vmatprep.subr.mxu0 0.0
    %1038 = vmatpush1.msra.mxu0 %v936
    %1039 = vmatprep.subr.mxu0 0.0
    %1040 = vmatpush1.msra.mxu0 %v937
    %1041 = vmatprep.subr.mxu0 0.0
    %1042 = vmatpush1.msra.mxu0 %v938
    %1043 = vmatprep.subr.mxu0 0.0
    %1044 = vmatpush1.msra.mxu0 %v939
    %1045 = vmatprep.subr.mxu0 0.0
    %1046 = vmatpush1.msra.mxu0 %v940
    %1047 = vmatprep.subr.mxu0 0.0
    %1048 = vmatpush1.msra.mxu0 %v941
    %1049 = vmatprep.subr.mxu0 0.0
    %1050 = vmatpush1.msra.mxu0 %v942
    %1051 = vmatprep.subr.mxu0 0.0
    %1052 = vmatpush1.msra.mxu0 %v943
    %1053 = vmatprep.mubr.f32.mxu0 %v844
    %1054 = vmatmul.mubr.f32.gmra.mrb[0].mxu0 %v842
    %v1055 = vpop.f32.mrb[0].mxu0
    %v1056 = vadd.f32 %v980, %v1055
    %v1057 = vpop.f32.mrb[0].mxu0
    %1058 = vdwg.mxu0
    %1059 = vmatprep.subr.mxu0 0.0
    %1060 = vmatpush1.msra.mxu0 %v944
    %1061 = vmatprep.subr.mxu0 0.0
    %1062 = vmatpush1.msra.mxu0 %v945
    %1063 = vmatprep.subr.mxu0 0.0
    %1064 = vmatpush1.msra.mxu0 %v946
    %1065 = vmatprep.subr.mxu0 0.0
    %1066 = vmatpush1.msra.mxu0 %v947
    %1067 = vmatprep.subr.mxu0 0.0
    %1068 = vmatpush1.msra.mxu0 %v948
    %1069 = vmatprep.subr.mxu0 0.0
    %1070 = vmatpush1.msra.mxu0 %v949
    %1071 = vmatprep.subr.mxu0 0.0
    %1072 = vmatpush1.msra.mxu0 %v950
    %1073 = vmatprep.subr.mxu0 0.0
    %1074 = vmatpush1.msra.mxu0 %v951
    %1075 = vmatprep.subr.mxu0 0.0
    %1076 = vmatpush1.msra.mxu0 %v952
    %1077 = vmatprep.subr.mxu0 0.0
    %1078 = vmatpush1.msra.mxu0 %v953
    %1079 = vmatprep.subr.mxu0 0.0
    %1080 = vmatpush1.msra.mxu0 %v954
    %1081 = vmatprep.subr.mxu0 0.0
    %1082 = vmatpush1.msra.mxu0 %v955
    %1083 = vmatprep.subr.mxu0 0.0
    %1084 = vmatpush1.msra.mxu0 %v956
    %1085 = vmatprep.subr.mxu0 0.0
    %1086 = vmatpush1.msra.mxu0 %v957
    %1087 = vmatprep.subr.mxu0 0.0
    %1088 = vmatpush1.msra.mxu0 %v958
    %1089 = vmatprep.subr.mxu0 0.0
    %1090 = vmatpush1.msra.mxu0 %v959
    %1091 = vmatprep.subr.mxu0 0.0
    %1092 = vmatpush1.msra.mxu0 %v960
    %1093 = vmatprep.subr.mxu0 0.0
    %1094 = vmatpush1.msra.mxu0 %v961
    %1095 = vmatprep.subr.mxu0 0.0
    %1096 = vmatpush1.msra.mxu0 %v962
    %1097 = vmatprep.subr.mxu0 0.0
    %1098 = vmatpush1.msra.mxu0 %v963
    %1099 = vmatprep.subr.mxu0 0.0
    %1100 = vmatpush1.msra.mxu0 %v964
    %1101 = vmatprep.subr.mxu0 0.0
    %1102 = vmatpush1.msra.mxu0 %v965
    %1103 = vmatprep.subr.mxu0 0.0
    %1104 = vmatpush1.msra.mxu0 %v966
    %1105 = vmatprep.subr.mxu0 0.0
    %1106 = vmatpush1.msra.mxu0 %v967
    %1107 = vmatprep.subr.mxu0 0.0
    %1108 = vmatpush1.msra.mxu0 %v968
    %1109 = vmatprep.subr.mxu0 0.0
    %1110 = vmatpush1.msra.mxu0 %v969
    %1111 = vmatprep.subr.mxu0 0.0
    %1112 = vmatpush1.msra.mxu0 %v970
    %1113 = vmatprep.subr.mxu0 0.0
    %1114 = vmatpush1.msra.mxu0 %v971
    %1115 = vmatprep.subr.mxu0 0.0
    %1116 = vmatpush1.msra.mxu0 %v972
    %1117 = vmatprep.subr.mxu0 0.0
    %1118 = vmatpush1.msra.mxu0 %v973
    %1119 = vmatprep.subr.mxu0 0.0
    %1120 = vmatpush1.msra.mxu0 %v987
    %1121 = vmatprep.subr.mxu0 0.0
    %1122 = vmatpush1.msra.mxu0 0.0
    %1123 = vmatprep.mubr.f32.mxu0 %v984
    %1124 = vmatmul.mubr.f32.gmra.mrb[0].mxu0 %v846
    %v1125 = vpop.f32.mrb[0].mxu0
    %v1126 = vadd.f32 %v1056, %v1125
    %v1127 = vpop.f32.mrb[0].mxu0
    %1128 = vdwg.mxu0
    %v1129 = vxor.u32 %v1126, 2147483648
    %v1130 = vmul.f32 %v1129, 1.442695
    %v1131 = vpow.pop %v1130
    %v1132 = vadd.f32 %v1131, 1.0
    %v1133 = vrcp.pop %v1132
    %v1134 = vmul.f32 1.0, %v1133
    %v1135 = vld [vmem:[%s7] sm:$0xf]
    %v1136 = vld [vmem:[%s7 + $0x4] sm:$0xf]
    %v1137 = vld [vmem:[%s7 + $0x8] sm:$0xf]
    %v1138 = vld [vmem:[%s7 + $0xc] sm:$0xf]
    %v1139 = vld [vmem:[%s7 + $0x10] sm:$0xf]
    %v1140 = vld [vmem:[%s7 + $0x14] sm:$0xf]
    %v1141 = vld [vmem:[%s7 + $0x18] sm:$0x1]
    %v1142 = vunpack.c.l.bf16 %v1135
    %v1143 = vunpack.c.l.bf16 %v1136
    %v1144 = vunpack.c.l.bf16 %v1137
    %v1145 = vunpack.c.l.bf16 %v1138
    %v1146 = vunpack.c.l.bf16 %v1139
    %v1147 = vunpack.c.l.bf16 %v1140
    %v1148 = vunpack.c.l.bf16 %v1141
    %v1149 = vld [vmem:[%s8] sm:$0x1]
    %v1151 = vlaneseq
    %v1152 = vshrl.u32 %v1151, 7
    %v1153 = vsub.s32 0, %v1152
    %v1154 = vrot.slane %v1149, %v1153
    %vm1156 = vcmask 408576
    %v1158 = vsel %vm1156, %v1134, 0
    %v1161 = vsel %vm105, %v1148, 0
    %1163 = vmatprep.subr.mxu0 0.0
    %1164 = vmatpush1.msra.mxu0 %v1142
    %1165 = vmatprep.subr.mxu0 0.0
    %1166 = vmatpush1.msra.mxu0 %v1143
    %1167 = vmatprep.subr.mxu0 0.0
    %1168 = vmatpush1.msra.mxu0 %v1144
    %1169 = vmatprep.subr.mxu0 0.0
    %1170 = vmatpush1.msra.mxu0 %v1145
    %1171 = vmatprep.subr.mxu0 0.0
    %1172 = vmatpush1.msra.mxu0 %v1146
    %1173 = vmatprep.subr.mxu0 0.0
    %1174 = vmatpush1.msra.mxu0 %v1147
    %1175 = vmatprep.subr.mxu0 0.0
    %1176 = vmatpush1.msra.mxu0 %v1161
    %1177 = vmatprep.subr.mxu0 0.0
    %1178 = vmatpush1.msra.mxu0 0.0
    %1179 = vmatprep.subr.mxu0 0.0
    %1180 = vmatpush1.msra.mxu0 0.0
    %1181 = vmatprep.subr.mxu0 0.0
    %1182 = vmatpush1.msra.mxu0 0.0
    %1183 = vmatprep.subr.mxu0 0.0
    %1184 = vmatpush1.msra.mxu0 0.0
    %1185 = vmatprep.subr.mxu0 0.0
    %1186 = vmatpush1.msra.mxu0 0.0
    %1187 = vmatprep.subr.mxu0 0.0
    %1188 = vmatpush1.msra.mxu0 0.0
    %1189 = vmatprep.subr.mxu0 0.0
    %1190 = vmatpush1.msra.mxu0 0.0
    %1191 = vmatprep.subr.mxu0 0.0
    %1192 = vmatpush1.msra.mxu0 0.0
    %1193 = vmatprep.subr.mxu0 0.0
    %1194 = vmatpush1.msra.mxu0 0.0
    %1195 = vmatprep.subr.mxu0 0.0
    %1196 = vmatpush1.msra.mxu0 0.0
    %1197 = vmatprep.subr.mxu0 0.0
    %1198 = vmatpush1.msra.mxu0 0.0
    %1199 = vmatprep.subr.mxu0 0.0
    %1200 = vmatpush1.msra.mxu0 0.0
    %1201 = vmatprep.subr.mxu0 0.0
    %1202 = vmatpush1.msra.mxu0 0.0
    %1203 = vmatprep.subr.mxu0 0.0
    %1204 = vmatpush1.msra.mxu0 0.0
    %1205 = vmatprep.subr.mxu0 0.0
    %1206 = vmatpush1.msra.mxu0 0.0
    %1207 = vmatprep.subr.mxu0 0.0
    %1208 = vmatpush1.msra.mxu0 0.0
    %1209 = vmatprep.subr.mxu0 0.0
    %1210 = vmatpush1.msra.mxu0 0.0
    %1211 = vmatprep.subr.mxu0 0.0
    %1212 = vmatpush1.msra.mxu0 0.0
    %1213 = vmatprep.subr.mxu0 0.0
    %1214 = vmatpush1.msra.mxu0 0.0
    %1215 = vmatprep.subr.mxu0 0.0
    %1216 = vmatpush1.msra.mxu0 0.0
    %1217 = vmatprep.subr.mxu0 0.0
    %1218 = vmatpush1.msra.mxu0 0.0
    %1219 = vmatprep.subr.mxu0 0.0
    %1220 = vmatpush1.msra.mxu0 0.0
    %1221 = vmatprep.subr.mxu0 0.0
    %1222 = vmatpush1.msra.mxu0 0.0
    %1223 = vmatprep.subr.mxu0 0.0
    %1224 = vmatpush1.msra.mxu0 0.0
    %1225 = vmatprep.subr.mxu0 0.0
    %1226 = vmatpush1.msra.mxu0 0.0
    %1227 = vmatprep.mubr.f32.mxu0 0.0
    %1228 = vmatmul.mubr.f32.gmra.mrb[0].mxu0 %v1158
    %v1229 = vpop.f32.mrb[0].mxu0
    %v1230 = vadd.f32 %v1154, %v1229
    %v1231 = vpop.f32.mrb[0].mxu0
    %1232 = vdwg.mxu0
    %v1233 = vxor.u32 %v1230, 2147483648
    %v1234 = vmul.f32 %v1233, 1.442695
    %v1235 = vpow.pop %v1234
    %v1236 = vadd.f32 %v1235, 1.0
    %v1237 = vrcp.pop %v1236
    %v1238 = vmul.f32 1.0, %v1237
    %v1239 = vld [vmem:[%s9] sm:$0xf]
    %v1240 = vld [vmem:[%s9 + $0x4] sm:$0xf]
    %v1241 = vld [vmem:[%s9 + $0x8] sm:$0xf]
    %v1242 = vld [vmem:[%s9 + $0xc] sm:$0x1]
    %v1243 = vunpack.c.l.bf16 %v1239
    %v1244 = vunpack.c.l.bf16 %v1240
    %v1245 = vunpack.c.l.bf16 %v1241
    %v1246 = vunpack.c.l.bf16 %v1242
    %v1247 = vld [vmem:[%s10] sm:$0x1]
    %v1249 = vlaneseq
    %v1250 = vshrl.u32 %v1249, 7
    %v1251 = vsub.s32 0, %v1250
    %v1252 = vrot.slane %v1247, %v1251
    %vm1254 = vcmask 203776
    %v1256 = vsel %vm1254, %v1238, 0
    %vm1258 = vcmask 1040384
    %v1260 = vsel %vm1258, %v1246, 0
    %1262 = vmatprep.subr.mxu0 0.0
    %1263 = vmatpush1.msra.mxu0 %v1243
    %1264 = vmatprep.subr.mxu0 0.0
    %1265 = vmatpush1.msra.mxu0 %v1244
    %1266 = vmatprep.subr.mxu0 0.0
    %1267 = vmatpush1.msra.mxu0 %v1245
    %1268 = vmatprep.subr.mxu0 0.0
    %1269 = vmatpush1.msra.mxu0 %v1260
    %1270 = vmatprep.subr.mxu0 0.0
    %1271 = vmatpush1.msra.mxu0 0.0
    %1272 = vmatprep.subr.mxu0 0.0
    %1273 = vmatpush1.msra.mxu0 0.0
    %1274 = vmatprep.subr.mxu0 0.0
    %1275 = vmatpush1.msra.mxu0 0.0
    %1276 = vmatprep.subr.mxu0 0.0
    %1277 = vmatpush1.msra.mxu0 0.0
    %1278 = vmatprep.subr.mxu0 0.0
    %1279 = vmatpush1.msra.mxu0 0.0
    %1280 = vmatprep.subr.mxu0 0.0
    %1281 = vmatpush1.msra.mxu0 0.0
    %1282 = vmatprep.subr.mxu0 0.0
    %1283 = vmatpush1.msra.mxu0 0.0
    %1284 = vmatprep.subr.mxu0 0.0
    %1285 = vmatpush1.msra.mxu0 0.0
    %1286 = vmatprep.subr.mxu0 0.0
    %1287 = vmatpush1.msra.mxu0 0.0
    %1288 = vmatprep.subr.mxu0 0.0
    %1289 = vmatpush1.msra.mxu0 0.0
    %1290 = vmatprep.subr.mxu0 0.0
    %1291 = vmatpush1.msra.mxu0 0.0
    %1292 = vmatprep.subr.mxu0 0.0
    %1293 = vmatpush1.msra.mxu0 0.0
    %1294 = vmatprep.subr.mxu0 0.0
    %1295 = vmatpush1.msra.mxu0 0.0
    %1296 = vmatprep.subr.mxu0 0.0
    %1297 = vmatpush1.msra.mxu0 0.0
    %1298 = vmatprep.subr.mxu0 0.0
    %1299 = vmatpush1.msra.mxu0 0.0
    %1300 = vmatprep.subr.mxu0 0.0
    %1301 = vmatpush1.msra.mxu0 0.0
    %1302 = vmatprep.subr.mxu0 0.0
    %1303 = vmatpush1.msra.mxu0 0.0
    %1304 = vmatprep.subr.mxu0 0.0
    %1305 = vmatpush1.msra.mxu0 0.0
    %1306 = vmatprep.subr.mxu0 0.0
    %1307 = vmatpush1.msra.mxu0 0.0
    %1308 = vmatprep.subr.mxu0 0.0
    %1309 = vmatpush1.msra.mxu0 0.0
    %1310 = vmatprep.subr.mxu0 0.0
    %1311 = vmatpush1.msra.mxu0 0.0
    %1312 = vmatprep.subr.mxu0 0.0
    %1313 = vmatpush1.msra.mxu0 0.0
    %1314 = vmatprep.subr.mxu0 0.0
    %1315 = vmatpush1.msra.mxu0 0.0
    %1316 = vmatprep.subr.mxu0 0.0
    %1317 = vmatpush1.msra.mxu0 0.0
    %1318 = vmatprep.subr.mxu0 0.0
    %1319 = vmatpush1.msra.mxu0 0.0
    %1320 = vmatprep.subr.mxu0 0.0
    %1321 = vmatpush1.msra.mxu0 0.0
    %1322 = vmatprep.subr.mxu0 0.0
    %1323 = vmatpush1.msra.mxu0 0.0
    %1324 = vmatprep.subr.mxu0 0.0
    %1325 = vmatpush1.msra.mxu0 0.0
    %1326 = vmatprep.mubr.f32.mxu0 0.0
    %1327 = vmatmul.mubr.f32.gmra.mrb[0].mxu0 %v1256
    %v1328 = vpop.f32.mrb[0].mxu0
    %v1329 = vadd.f32 %v1252, %v1328
    %v1330 = vpop.f32.mrb[0].mxu0
    %1331 = vdwg.mxu0
    %1332 = vst [vmem:[#allocation5] sm:$0x3] %v1329
    // Predicated region
    $region50: #{tpu_custom_call.1} parent=1 // pred_check
      _
    $region51: #{tpu_custom_call.1} parent=1 // pred_check_branch
      %1334 = sbr.rel (0) target = $region53
    $region52: #{tpu_custom_call.1} parent=1 // pred_region
      %s1336 = ssub.s32 32, 32
      %1337 = vsyncadd [#allocation4], %s1336
      %s1339 = sshll.u32 [#allocation5], 4
      %s1340 = int_to_ptr.vmem [resolvable:$true] %s1339
      %1342 = dma.vmem_to_hbm [thread:$0]  %s1340, 32, %s11, [#allocation4]
    $region53: #{tpu_custom_call.1} parent=1 // pred_fallthru
      _
    // Predicated region
    $region54: #{tpu_custom_call.1} parent=1 // pred_check
      _
    $region55: #{tpu_custom_call.1} parent=1 // pred_check_branch
      %1344 = sbr.rel (0) target = $region57
    $region56: #{tpu_custom_call.1} parent=1 // pred_region
      %1345 = dma.done [#allocation4], 32
    $region57: #{tpu_custom_call.1} parent=1 // pred_fallthru
      _
    %1346 = vsyncpa [#allocation3], 1
    %1347 = vsyncpa [#allocation4], 1

</llo_original>
